<compile_context>
chip_gen: v7x
topology: tpu7x:2x2x1
jax: 0.10.0
libtpu: 0.0.40
codegen_flags: <defaults>
</compile_context>

<pallas_src>
import numpy as np
import jax
import jax.numpy as jnp
from jax import lax
from jax.experimental import pallas as pl
from jax.experimental.pallas import tpu as pltpu


# ----------------------------------------------------------------------------
# Pallas kernel (one ConvLSTM layer; grid = (batch,), time loop inside)
# ----------------------------------------------------------------------------
def _make_layer_kernel(T, H, W, Cin, Hd, offsets):
    HW = H * W
    Ctot = Cin + Hd

    def kernel(x_ref, w_ref, b_ref, gamma_ref, beta_ref, mask_ref,
               hseq_ref, hlast_ref, clast_ref):
        # Hoist grid-invariant loads out of the time loop.
        w2 = w_ref[...]          # (4Hd, 9*Ctot)
        bias = b_ref[...]        # (4Hd, 1)
        gamma = gamma_ref[...]   # (4Hd, HW)
        beta = beta_ref[...]     # (4Hd, HW)
        masks = mask_ref[...]    # (num_taps, HW)  0/1 boundary masks

        def step(t, carry):
            h_cur, c_cur = carry
            xt = x_ref[0, t]                                   # (Cin, HW)

            # combined channels of (x_t, h_cur): (Ctot, HW)
            combined = jnp.concatenate([xt, h_cur], axis=0)

            # 3x3 "same" conv: stack the 9 spatially shifted copies
            # (roll along the flattened HW lane axis + zero-pad mask).
            taps = []
            for k, off in enumerate(offsets):
                if off == 0:
                    rolled = combined
                else:
                    rolled = pltpu.roll(combined, shift=(-off) % HW, axis=1)
                taps.append(rolled * masks[k:k + 1, :])
            stacked = jnp.concatenate(taps, axis=0)            # (9*Ctot, HW)

            # One fused matmul for all taps / both operands: (4Hd, HW)
            conv = jnp.dot(w2, stacked,
                           preferred_element_type=jnp.float32) + bias

            # LayerNorm over the whole (4*Hd, H, W) block (biased var, eps=1e-5)
            mean = jnp.mean(conv)
            var = jnp.mean((conv - mean) ** 2)
            y = (conv - mean) * lax.rsqrt(var + 1e-5) * gamma + beta

            # LSTM gates (f32 on EUP)
            i_g = jax.nn.sigmoid(y[0 * Hd:1 * Hd])
            f_g = jax.nn.sigmoid(y[1 * Hd:2 * Hd])
            o_g = jax.nn.sigmoid(y[2 * Hd:3 * Hd])
            g_g = jnp.tanh(y[3 * Hd:4 * Hd])

            c_next = f_g * c_cur + i_g * g_g
            h_out = o_g * jnp.tanh(c_next) + xt   # residual add (ConvLSTM.forward)

            hseq_ref[0, t] = h_out
            return (h_out, c_next)

        h0 = jnp.zeros((Hd, HW), jnp.float32)
        c0 = jnp.zeros((Hd, HW), jnp.float32)
        h_fin, c_fin = lax.fori_loop(0, T, step, (h0, c0), unroll=True)

        hlast_ref[0] = h_fin
        clast_ref[0] = c_fin

    return kernel


def convlstm_layer_pallas(x_seq, w2, b2, g2, be2, masks, offsets, H, W):
    """x_seq: (B, T, Cin, H*W) f32. Returns (h_seq, h_last, c_last) in (C, HW) layout."""
    B, T, Cin, HW = x_seq.shape
    C4 = w2.shape[0]
    Hd = C4 // 4
    Ctot = Cin + Hd
    num_taps = len(offsets)
    kernel = _make_layer_kernel(T, H, W, Cin, Hd, offsets)

    grid_spec = pltpu.PrefetchScalarGridSpec(
        num_scalar_prefetch=0,
        grid=(B,),
        in_specs=[
            pl.BlockSpec((1, T, Cin, HW), lambda b: (b, 0, 0, 0)),      # x sequence
            pl.BlockSpec((C4, num_taps * Ctot), lambda b: (0, 0)),      # fused conv weight
            pl.BlockSpec((C4, 1), lambda b: (0, 0)),                    # bias
            pl.BlockSpec((C4, HW), lambda b: (0, 0)),                   # LN gamma
            pl.BlockSpec((C4, HW), lambda b: (0, 0)),                   # LN beta
            pl.BlockSpec((num_taps, HW), lambda b: (0, 0)),             # boundary masks
        ],
        out_specs=[
            pl.BlockSpec((1, T, Hd, HW), lambda b: (b, 0, 0, 0)),       # h sequence
            pl.BlockSpec((1, Hd, HW), lambda b: (b, 0, 0)),             # h last
            pl.BlockSpec((1, Hd, HW), lambda b: (b, 0, 0)),             # c last
        ],
    )
    out_shapes = (
        jax.ShapeDtypeStruct((B, T, Hd, HW), jnp.float32),
        jax.ShapeDtypeStruct((B, Hd, HW), jnp.float32),
        jax.ShapeDtypeStruct((B, Hd, HW), jnp.float32),
    )
    return pl.pallas_call(
        kernel,
        out_shape=out_shapes,
        grid_spec=grid_spec,
        compiler_params=pltpu.CompilerParams(
            dimension_semantics=("parallel",)),
    )(x_seq, w2, b2, g2, be2, masks)


# ----------------------------------------------------------------------------
# Parameter setup / layout glue (plain JAX / numpy)
# ----------------------------------------------------------------------------
def init_cell_params(key, input_dim, hidden_dim, ksize, H, W):
    """Deterministic synthetic params with the same shapes as ConvLSTMCell.__init__."""
    Cin, Hd = input_dim, hidden_dim
    Ctot = Cin + Hd
    kh, kw = ksize
    k1, k2, k3, k4 = jax.random.split(key, 4)
    bound = 1.0 / np.sqrt(Ctot * kh * kw)
    w = jax.random.uniform(k1, (4 * Hd, Ctot, kh, kw), jnp.float32, -bound, bound)
    b = jax.random.uniform(k2, (4 * Hd,), jnp.float32, -bound, bound)
    gamma = 1.0 + 0.1 * jax.random.normal(k3, (4 * Hd, H, W), jnp.float32)
    beta = 0.1 * jax.random.normal(k4, (4 * Hd, H, W), jnp.float32)
    return {"w": w, "b": b, "gamma": gamma, "beta": beta}


def prep_params_for_kernel(p, Cin, Hd, H, W):
    w, b, gamma, beta = p["w"], p["b"], p["gamma"], p["beta"]
    kh, kw = w.shape[2], w.shape[3]
    Ctot = Cin + Hd
    # (4Hd, Ctot, kh, kw) -> (4Hd, kh*kw*Ctot); column index = tap_k*Ctot + c,
    # with tap_k = ky*kw + kx and c spanning [x channels, h channels].
    w2 = jnp.transpose(w, (0, 2, 3, 1)).reshape(4 * Hd, kh * kw * Ctot)
    b2 = b.reshape(4 * Hd, 1)
    g2 = gamma.reshape(4 * Hd, H * W)
    be2 = beta.reshape(4 * Hd, H * W)
    return w2, b2, g2, be2


def make_tap_offsets_and_masks(H, W, ksize):
    """Flattened lane-roll offsets dy*W+dx and 0/1 validity masks per tap."""
    kh, kw = ksize
    deltas = [(ky - kh // 2, kx - kw // 2) for ky in range(kh) for kx in range(kw)]
    offsets = [dy * W + dx for dy, dx in deltas]
    HW = H * W
    masks = np.zeros((len(deltas), HW), np.float32)
    for k, (dy, dx) in enumerate(deltas):
        for h in range(H):
            for w in range(W):
                if 0 <= h + dy < H and 0 <= w + dx < W:
                    masks[k, h * W + w] = 1.0
    return offsets, jnp.asarray(masks)


def convlstm_f_forward(x_btchw, layer_params, ksize):
    """Mirrors ConvLSTM_F.forward (batch_first=True, return_all_layers=False)."""
    B, T, C, H, W = x_btchw.shape
    offsets, masks = make_tap_offsets_and_masks(H, W, ksize)
    cur = x_btchw.reshape(B, T, C, H * W)          # channels-on-sublane, HW-on-lane
    h_last = c_last = None
    for p in layer_params:
        Cin = cur.shape[2]
        Hd = p["b"].shape[0] // 4
        assert Cin == Hd, "residual add in ConvLSTM.forward requires input_dim == hidden_dim"
        w2, b2, g2, be2 = prep_params_for_kernel(p, Cin, Hd, H, W)
        cur, h_last, c_last = convlstm_layer_pallas(
            cur, w2, b2, g2, be2, masks, offsets, H, W)
    Hd = cur.shape[2]
    layer_output = cur.reshape(B, T, Hd, H, W)
    h_out = h_last.reshape(B, Hd, H, W)
    c_out = c_last.reshape(B, Hd, H, W)
    return [layer_output], [(h_out, c_out)]


# ----------------------------------------------------------------------------
# Pure-JAX reference (mirrors the PyTorch forward, NCHW)
# ----------------------------------------------------------------------------
def ref_forward(x, layer_params):
    B, T, C, H, W = x.shape
    cur = x
    h = c = None
    for p in layer_params:
        w, b, gamma, beta = p["w"], p["b"], p["gamma"], p["beta"]
        Hd = b.shape[0] // 4
        h = jnp.zeros((B, Hd, H, W), jnp.float32)
        c = jnp.zeros((B, Hd, H, W), jnp.float32)
        outs = []
        for t in range(T):
            xt = cur[:, t]
            comb = jnp.concatenate([xt, h], axis=1)
            conv = lax.conv_general_dilated(
                comb, w, (1, 1), "SAME",
                dimension_numbers=("NCHW", "OIHW", "NCHW"),
                precision=lax.Precision.HIGHEST) + b[None, :, None, None]
            mean = jnp.mean(conv, axis=(1, 2, 3), keepdims=True)
            var = jnp.mean((conv - mean) ** 2, axis=(1, 2, 3), keepdims=True)
            y = (conv - mean) * lax.rsqrt(var + 1e-5) * gamma[None] + beta[None]
            i_g = jax.nn.sigmoid(y[:, 0 * Hd:1 * Hd])
            f_g = jax.nn.sigmoid(y[:, 1 * Hd:2 * Hd])
            o_g = jax.nn.sigmoid(y[:, 2 * Hd:3 * Hd])
            g_g = jnp.tanh(y[:, 3 * Hd:4 * Hd])
            c = f_g * c + i_g * g_g
            h = o_g * jnp.tanh(c) + xt
            outs.append(h)
        cur = jnp.stack(outs, axis=1)
    return cur, h, c


# ----------------------------------------------------------------------------
# Main
# ----------------------------------------------------------------------------
if __name__ == "__main__":
    # size=4  =>  LayerNorm normalized spatial = 64/size = 16 = H = W
    B, T, C, H, W = 2, 4, 4, 16, 16
    hidden_dim = 4          # must equal input dim (residual add in ConvLSTM.forward)
    num_layers = 2
    ksize = (3, 3)

    key = jax.random.PRNGKey(0)
    kx, kp = jax.random.split(key)
    x = jax.random.normal(kx, (B, T, C, H, W), jnp.float32)

    layer_params = []
    cin = C
    for _ in range(num_layers):
        kp, kl = jax.random.split(kp)
        layer_params.append(init_cell_params(kl, cin, hidden_dim, ksize, H, W))
        cin = hidden_dim

    (out_list, state_list) = convlstm_f_forward(x, layer_params, ksize)
    layer_output = jax.block_until_ready(out_list[0])
    h_last, c_last = state_list[0]
    h_last = jax.block_until_ready(h_last)
    c_last = jax.block_until_ready(c_last)

    ref_out, ref_h, ref_c = ref_forward(x, layer_params)
    np.testing.assert_allclose(np.asarray(layer_output), np.asarray(ref_out),
                               atol=1e-3, rtol=1e-3)
    np.testing.assert_allclose(np.asarray(h_last), np.asarray(ref_h), atol=1e-3, rtol=1e-3)
    np.testing.assert_allclose(np.asarray(c_last), np.asarray(ref_c), atol=1e-3, rtol=1e-3)

    print("KERNEL_OK")
</pallas_src>

<mosaic_0001>
module attributes {stable_mosaic.version = 11 : i64} {
  func.func @kernel(%arg0: i32, %arg1: memref<1x4x4x256xf32, #tpu.memory_space<vmem>>, %arg2: memref<16x72xf32, #tpu.memory_space<vmem>>, %arg3: memref<16x1xf32, #tpu.memory_space<vmem>>, %arg4: memref<16x256xf32, #tpu.memory_space<vmem>>, %arg5: memref<16x256xf32, #tpu.memory_space<vmem>>, %arg6: memref<9x256xf32, #tpu.memory_space<vmem>>, %arg7: memref<1x4x4x256xf32, #tpu.memory_space<vmem>>, %arg8: memref<1x4x256xf32, #tpu.memory_space<vmem>>, %arg9: memref<1x4x256xf32, #tpu.memory_space<vmem>>) attributes {dimension_semantics = [#tpu.dimension_semantics<parallel>], iteration_bounds = array<i64: 2>, scalar_prefetch = 0 : i64, scratch_operands = 0 : i64, tpu.core_type = #tpu.core_type<tc>, window_params = [{transform_indices = @transform_0, window_bounds = array<i64: 1, 4, 4, 256>}, {pipeline_mode = #tpu.pipeline_mode<synchronous>, transform_indices = @transform_1, window_bounds = array<i64: 16, 72>}, {pipeline_mode = #tpu.pipeline_mode<synchronous>, transform_indices = @transform_2, window_bounds = array<i64: 16, 1>}, {pipeline_mode = #tpu.pipeline_mode<synchronous>, transform_indices = @transform_3, window_bounds = array<i64: 16, 256>}, {pipeline_mode = #tpu.pipeline_mode<synchronous>, transform_indices = @transform_4, window_bounds = array<i64: 16, 256>}, {pipeline_mode = #tpu.pipeline_mode<synchronous>, transform_indices = @transform_5, window_bounds = array<i64: 9, 256>}, {transform_indices = @transform_6, window_bounds = array<i64: 1, 4, 4, 256>}, {transform_indices = @transform_7, window_bounds = array<i64: 1, 4, 256>}, {transform_indices = @transform_8, window_bounds = array<i64: 1, 4, 256>}]} {
    %c0 = arith.constant 0 : index
    %c0_0 = arith.constant 0 : index
    %0 = vector.load %arg2[%c0, %c0_0] : memref<16x72xf32, #tpu.memory_space<vmem>>, vector<16x72xf32>
    %c0_1 = arith.constant 0 : index
    %c0_2 = arith.constant 0 : index
    %1 = vector.load %arg3[%c0_1, %c0_2] : memref<16x1xf32, #tpu.memory_space<vmem>>, vector<16x1xf32>
    %c0_3 = arith.constant 0 : index
    %c0_4 = arith.constant 0 : index
    %2 = vector.load %arg4[%c0_3, %c0_4] : memref<16x256xf32, #tpu.memory_space<vmem>>, vector<16x256xf32>
    %c0_5 = arith.constant 0 : index
    %c0_6 = arith.constant 0 : index
    %3 = vector.load %arg5[%c0_5, %c0_6] : memref<16x256xf32, #tpu.memory_space<vmem>>, vector<16x256xf32>
    %c0_7 = arith.constant 0 : index
    %c0_8 = arith.constant 0 : index
    %4 = vector.load %arg6[%c0_7, %c0_8] : memref<9x256xf32, #tpu.memory_space<vmem>>, vector<9x256xf32>
    %cst = arith.constant 0.000000e+00 : f32
    %5 = vector.broadcast %cst : f32 to vector<4x256xf32>
    %cst_9 = arith.constant 0.000000e+00 : f32
    %6 = vector.broadcast %cst_9 : f32 to vector<4x256xf32>
    %c0_i32 = arith.constant 0 : i32
    %c0_10 = arith.constant 0 : index
    %7 = arith.index_cast %c0_i32 : i32 to index
    %c0_11 = arith.constant 0 : index
    %c0_12 = arith.constant 0 : index
    %8 = vector.load %arg1[%c0_10, %7, %c0_11, %c0_12] : memref<1x4x4x256xf32, #tpu.memory_space<vmem>>, vector<1x1x4x256xf32>
    %9 = vector.shape_cast %8 : vector<1x1x4x256xf32> to vector<4x256xf32>
    %10 = tpu.concatenate %9, %5 in 0 : vector<4x256xf32>, vector<4x256xf32> -> vector<8x256xf32>
    %c17_i32 = arith.constant 17 : i32
    %11 = tpu.dynamic_rotate %10 by %c17_i32 dim 1 : vector<8x256xf32>, i32 -> vector<8x256xf32>
    %12 = vector.extract_strided_slice %4 {offsets = [0, 0], sizes = [1, 256], strides = [1, 1]} : vector<9x256xf32> to vector<1x256xf32>
    %13 = vector.broadcast %12 : vector<1x256xf32> to vector<8x256xf32>
    %14 = arith.mulf %11, %13 : vector<8x256xf32>
    %c16_i32 = arith.constant 16 : i32
    %15 = tpu.dynamic_rotate %10 by %c16_i32 dim 1 : vector<8x256xf32>, i32 -> vector<8x256xf32>
    %16 = vector.extract_strided_slice %4 {offsets = [1, 0], sizes = [1, 256], strides = [1, 1]} : vector<9x256xf32> to vector<1x256xf32>
    %17 = vector.broadcast %16 : vector<1x256xf32> to vector<8x256xf32>
    %18 = arith.mulf %15, %17 : vector<8x256xf32>
    %c15_i32 = arith.constant 15 : i32
    %19 = tpu.dynamic_rotate %10 by %c15_i32 dim 1 : vector<8x256xf32>, i32 -> vector<8x256xf32>
    %20 = vector.extract_strided_slice %4 {offsets = [2, 0], sizes = [1, 256], strides = [1, 1]} : vector<9x256xf32> to vector<1x256xf32>
    %21 = vector.broadcast %20 : vector<1x256xf32> to vector<8x256xf32>
    %22 = arith.mulf %19, %21 : vector<8x256xf32>
    %c1_i32 = arith.constant 1 : i32
    %23 = tpu.dynamic_rotate %10 by %c1_i32 dim 1 : vector<8x256xf32>, i32 -> vector<8x256xf32>
    %24 = vector.extract_strided_slice %4 {offsets = [3, 0], sizes = [1, 256], strides = [1, 1]} : vector<9x256xf32> to vector<1x256xf32>
    %25 = vector.broadcast %24 : vector<1x256xf32> to vector<8x256xf32>
    %26 = arith.mulf %23, %25 : vector<8x256xf32>
    %27 = vector.extract_strided_slice %4 {offsets = [4, 0], sizes = [1, 256], strides = [1, 1]} : vector<9x256xf32> to vector<1x256xf32>
    %28 = vector.broadcast %27 : vector<1x256xf32> to vector<8x256xf32>
    %29 = arith.mulf %10, %28 : vector<8x256xf32>
    %c255_i32 = arith.constant 255 : i32
    %30 = tpu.dynamic_rotate %10 by %c255_i32 dim 1 : vector<8x256xf32>, i32 -> vector<8x256xf32>
    %31 = vector.extract_strided_slice %4 {offsets = [5, 0], sizes = [1, 256], strides = [1, 1]} : vector<9x256xf32> to vector<1x256xf32>
    %32 = vector.broadcast %31 : vector<1x256xf32> to vector<8x256xf32>
    %33 = arith.mulf %30, %32 : vector<8x256xf32>
    %c241_i32 = arith.constant 241 : i32
    %34 = tpu.dynamic_rotate %10 by %c241_i32 dim 1 : vector<8x256xf32>, i32 -> vector<8x256xf32>
    %35 = vector.extract_strided_slice %4 {offsets = [6, 0], sizes = [1, 256], strides = [1, 1]} : vector<9x256xf32> to vector<1x256xf32>
    %36 = vector.broadcast %35 : vector<1x256xf32> to vector<8x256xf32>
    %37 = arith.mulf %34, %36 : vector<8x256xf32>
    %c240_i32 = arith.constant 240 : i32
    %38 = tpu.dynamic_rotate %10 by %c240_i32 dim 1 : vector<8x256xf32>, i32 -> vector<8x256xf32>
    %39 = vector.extract_strided_slice %4 {offsets = [7, 0], sizes = [1, 256], strides = [1, 1]} : vector<9x256xf32> to vector<1x256xf32>
    %40 = vector.broadcast %39 : vector<1x256xf32> to vector<8x256xf32>
    %41 = arith.mulf %38, %40 : vector<8x256xf32>
    %c239_i32 = arith.constant 239 : i32
    %42 = tpu.dynamic_rotate %10 by %c239_i32 dim 1 : vector<8x256xf32>, i32 -> vector<8x256xf32>
    %43 = vector.extract_strided_slice %4 {offsets = [8, 0], sizes = [1, 256], strides = [1, 1]} : vector<9x256xf32> to vector<1x256xf32>
    %44 = vector.broadcast %43 : vector<1x256xf32> to vector<8x256xf32>
    %45 = arith.mulf %42, %44 : vector<8x256xf32>
    %46 = tpu.concatenate %14, %18, %22, %26, %29, %33, %37, %41, %45 in 0 : vector<8x256xf32>, vector<8x256xf32>, vector<8x256xf32>, vector<8x256xf32>, vector<8x256xf32>, vector<8x256xf32>, vector<8x256xf32>, vector<8x256xf32>, vector<8x256xf32> -> vector<72x256xf32>
    %cst_13 = arith.constant dense<0.000000e+00> : vector<16x256xf32>
    %47 = tpu.matmul %0, %46, %cst_13 {dimension_numbers = #tpu.dot_dimension_numbers<[1], [0], [0], [1], [0, 0, 1, 1], [], []>} : vector<16x72xf32>, vector<72x256xf32>, vector<16x256xf32> -> vector<16x256xf32>
    %48 = vector.broadcast %1 : vector<16x1xf32> to vector<16x256xf32>
    %49 = arith.addf %47, %48 : vector<16x256xf32>
    %50 = vector.shape_cast %49 : vector<16x256xf32> to vector<1x16x256xf32>
    %cst_14 = arith.constant dense<0.000000e+00> : vector<1xf32>
    %51 = vector.multi_reduction <add>, %50, %cst_14 [1, 2] : vector<1x16x256xf32> to vector<1xf32>
    %52 = vector.shape_cast %51 : vector<1xf32> to vector<1x1x1xf32>
    %53 = vector.extract %52[0, 0, 0] : f32 from vector<1x1x1xf32>
    %cst_15 = arith.constant 4.096000e+03 : f32
    %54 = arith.divf %53, %cst_15 : f32
    %55 = vector.broadcast %54 : f32 to vector<16x256xf32>
    %56 = arith.subf %49, %55 : vector<16x256xf32>
    %57 = arith.mulf %56, %56 : vector<16x256xf32>
    %58 = vector.shape_cast %57 : vector<16x256xf32> to vector<1x16x256xf32>
    %cst_16 = arith.constant dense<0.000000e+00> : vector<1xf32>
    %59 = vector.multi_reduction <add>, %58, %cst_16 [1, 2] : vector<1x16x256xf32> to vector<1xf32>
    %60 = vector.shape_cast %59 : vector<1xf32> to vector<1x1x1xf32>
    %61 = vector.extract %60[0, 0, 0] : f32 from vector<1x1x1xf32>
    %cst_17 = arith.constant 4.096000e+03 : f32
    %62 = arith.divf %61, %cst_17 : f32
    %63 = vector.broadcast %54 : f32 to vector<16x256xf32>
    %64 = arith.subf %49, %63 : vector<16x256xf32>
    %cst_18 = arith.constant 9.99999974E-6 : f32
    %65 = arith.addf %62, %cst_18 : f32
    %66 = math.rsqrt %65 : f32
    %67 = vector.broadcast %66 : f32 to vector<16x256xf32>
    %68 = arith.mulf %64, %67 : vector<16x256xf32>
    %69 = arith.mulf %68, %2 : vector<16x256xf32>
    %70 = arith.addf %69, %3 : vector<16x256xf32>
    %71 = vector.extract_strided_slice %70 {offsets = [0, 0], sizes = [4, 256], strides = [1, 1]} : vector<16x256xf32> to vector<4x256xf32>
    %72 = arith.negf %71 : vector<4x256xf32>
    %73 = math.exp %72 : vector<4x256xf32>
    %cst_19 = arith.constant 1.000000e+00 : f32
    %74 = vector.broadcast %cst_19 : f32 to vector<4x256xf32>
    %75 = arith.addf %74, %73 : vector<4x256xf32>
    %76 = arith.divf %74, %75 : vector<4x256xf32>
    %77 = vector.extract_strided_slice %70 {offsets = [4, 0], sizes = [4, 256], strides = [1, 1]} : vector<16x256xf32> to vector<4x256xf32>
    %78 = arith.negf %77 : vector<4x256xf32>
    %79 = math.exp %78 : vector<4x256xf32>
    %cst_20 = arith.constant 1.000000e+00 : f32
    %80 = vector.broadcast %cst_20 : f32 to vector<4x256xf32>
    %81 = arith.addf %80, %79 : vector<4x256xf32>
    %82 = arith.divf %80, %81 : vector<4x256xf32>
    %83 = vector.extract_strided_slice %70 {offsets = [8, 0], sizes = [4, 256], strides = [1, 1]} : vector<16x256xf32> to vector<4x256xf32>
    %84 = arith.negf %83 : vector<4x256xf32>
    %85 = math.exp %84 : vector<4x256xf32>
    %cst_21 = arith.constant 1.000000e+00 : f32
    %86 = vector.broadcast %cst_21 : f32 to vector<4x256xf32>
    %87 = arith.addf %86, %85 : vector<4x256xf32>
    %88 = arith.divf %86, %87 : vector<4x256xf32>
    %89 = vector.extract_strided_slice %70 {offsets = [12, 0], sizes = [4, 256], strides = [1, 1]} : vector<16x256xf32> to vector<4x256xf32>
    %90 = math.tanh %89 : vector<4x256xf32>
    %91 = arith.mulf %82, %6 : vector<4x256xf32>
    %92 = arith.mulf %76, %90 : vector<4x256xf32>
    %93 = arith.addf %91, %92 : vector<4x256xf32>
    %94 = math.tanh %93 : vector<4x256xf32>
    %95 = arith.mulf %88, %94 : vector<4x256xf32>
    %96 = arith.addf %95, %9 : vector<4x256xf32>
    %c0_22 = arith.constant 0 : index
    %97 = arith.index_cast %c0_i32 : i32 to index
    %c0_23 = arith.constant 0 : index
    %c0_24 = arith.constant 0 : index
    %98 = vector.load %arg7[%c0_22, %97, %c0_23, %c0_24] : memref<1x4x4x256xf32, #tpu.memory_space<vmem>>, vector<1x1x4x256xf32>
    %99 = vector.shape_cast %98 : vector<1x1x4x256xf32> to vector<4x256xf32>
    %100 = vector.shape_cast %96 : vector<4x256xf32> to vector<1x1x4x256xf32>
    tpu.vector_store %arg7[%c0_22, %97, %c0_23, %c0_24], %100 {strides = array<i32>} : memref<1x4x4x256xf32, #tpu.memory_space<vmem>>, vector<1x1x4x256xf32>,
    %c1_i32_25 = arith.constant 1 : i32
    %c0_26 = arith.constant 0 : index
    %101 = arith.index_cast %c1_i32_25 : i32 to index
    %c0_27 = arith.constant 0 : index
    %c0_28 = arith.constant 0 : index
    %102 = vector.load %arg1[%c0_26, %101, %c0_27, %c0_28] : memref<1x4x4x256xf32, #tpu.memory_space<vmem>>, vector<1x1x4x256xf32>
    %103 = vector.shape_cast %102 : vector<1x1x4x256xf32> to vector<4x256xf32>
    %104 = tpu.concatenate %103, %96 in 0 : vector<4x256xf32>, vector<4x256xf32> -> vector<8x256xf32>
    %c17_i32_29 = arith.constant 17 : i32
    %105 = tpu.dynamic_rotate %104 by %c17_i32_29 dim 1 : vector<8x256xf32>, i32 -> vector<8x256xf32>
    %106 = vector.extract_strided_slice %4 {offsets = [0, 0], sizes = [1, 256], strides = [1, 1]} : vector<9x256xf32> to vector<1x256xf32>
    %107 = vector.broadcast %106 : vector<1x256xf32> to vector<8x256xf32>
    %108 = arith.mulf %105, %107 : vector<8x256xf32>
    %c16_i32_30 = arith.constant 16 : i32
    %109 = tpu.dynamic_rotate %104 by %c16_i32_30 dim 1 : vector<8x256xf32>, i32 -> vector<8x256xf32>
    %110 = vector.extract_strided_slice %4 {offsets = [1, 0], sizes = [1, 256], strides = [1, 1]} : vector<9x256xf32> to vector<1x256xf32>
    %111 = vector.broadcast %110 : vector<1x256xf32> to vector<8x256xf32>
    %112 = arith.mulf %109, %111 : vector<8x256xf32>
    %c15_i32_31 = arith.constant 15 : i32
    %113 = tpu.dynamic_rotate %104 by %c15_i32_31 dim 1 : vector<8x256xf32>, i32 -> vector<8x256xf32>
    %114 = vector.extract_strided_slice %4 {offsets = [2, 0], sizes = [1, 256], strides = [1, 1]} : vector<9x256xf32> to vector<1x256xf32>
    %115 = vector.broadcast %114 : vector<1x256xf32> to vector<8x256xf32>
    %116 = arith.mulf %113, %115 : vector<8x256xf32>
    %c1_i32_32 = arith.constant 1 : i32
    %117 = tpu.dynamic_rotate %104 by %c1_i32_32 dim 1 : vector<8x256xf32>, i32 -> vector<8x256xf32>
    %118 = vector.extract_strided_slice %4 {offsets = [3, 0], sizes = [1, 256], strides = [1, 1]} : vector<9x256xf32> to vector<1x256xf32>
    %119 = vector.broadcast %118 : vector<1x256xf32> to vector<8x256xf32>
    %120 = arith.mulf %117, %119 : vector<8x256xf32>
    %121 = vector.extract_strided_slice %4 {offsets = [4, 0], sizes = [1, 256], strides = [1, 1]} : vector<9x256xf32> to vector<1x256xf32>
    %122 = vector.broadcast %121 : vector<1x256xf32> to vector<8x256xf32>
    %123 = arith.mulf %104, %122 : vector<8x256xf32>
    %c255_i32_33 = arith.constant 255 : i32
    %124 = tpu.dynamic_rotate %104 by %c255_i32_33 dim 1 : vector<8x256xf32>, i32 -> vector<8x256xf32>
    %125 = vector.extract_strided_slice %4 {offsets = [5, 0], sizes = [1, 256], strides = [1, 1]} : vector<9x256xf32> to vector<1x256xf32>
    %126 = vector.broadcast %125 : vector<1x256xf32> to vector<8x256xf32>
    %127 = arith.mulf %124, %126 : vector<8x256xf32>
    %c241_i32_34 = arith.constant 241 : i32
    %128 = tpu.dynamic_rotate %104 by %c241_i32_34 dim 1 : vector<8x256xf32>, i32 -> vector<8x256xf32>
    %129 = vector.extract_strided_slice %4 {offsets = [6, 0], sizes = [1, 256], strides = [1, 1]} : vector<9x256xf32> to vector<1x256xf32>
    %130 = vector.broadcast %129 : vector<1x256xf32> to vector<8x256xf32>
    %131 = arith.mulf %128, %130 : vector<8x256xf32>
    %c240_i32_35 = arith.constant 240 : i32
    %132 = tpu.dynamic_rotate %104 by %c240_i32_35 dim 1 : vector<8x256xf32>, i32 -> vector<8x256xf32>
    %133 = vector.extract_strided_slice %4 {offsets = [7, 0], sizes = [1, 256], strides = [1, 1]} : vector<9x256xf32> to vector<1x256xf32>
    %134 = vector.broadcast %133 : vector<1x256xf32> to vector<8x256xf32>
    %135 = arith.mulf %132, %134 : vector<8x256xf32>
    %c239_i32_36 = arith.constant 239 : i32
    %136 = tpu.dynamic_rotate %104 by %c239_i32_36 dim 1 : vector<8x256xf32>, i32 -> vector<8x256xf32>
    %137 = vector.extract_strided_slice %4 {offsets = [8, 0], sizes = [1, 256], strides = [1, 1]} : vector<9x256xf32> to vector<1x256xf32>
    %138 = vector.broadcast %137 : vector<1x256xf32> to vector<8x256xf32>
    %139 = arith.mulf %136, %138 : vector<8x256xf32>
    %140 = tpu.concatenate %108, %112, %116, %120, %123, %127, %131, %135, %139 in 0 : vector<8x256xf32>, vector<8x256xf32>, vector<8x256xf32>, vector<8x256xf32>, vector<8x256xf32>, vector<8x256xf32>, vector<8x256xf32>, vector<8x256xf32>, vector<8x256xf32> -> vector<72x256xf32>
    %cst_37 = arith.constant dense<0.000000e+00> : vector<16x256xf32>
    %141 = tpu.matmul %0, %140, %cst_37 {dimension_numbers = #tpu.dot_dimension_numbers<[1], [0], [0], [1], [0, 0, 1, 1], [], []>} : vector<16x72xf32>, vector<72x256xf32>, vector<16x256xf32> -> vector<16x256xf32>
    %142 = vector.broadcast %1 : vector<16x1xf32> to vector<16x256xf32>
    %143 = arith.addf %141, %142 : vector<16x256xf32>
    %144 = vector.shape_cast %143 : vector<16x256xf32> to vector<1x16x256xf32>
    %cst_38 = arith.constant dense<0.000000e+00> : vector<1xf32>
    %145 = vector.multi_reduction <add>, %144, %cst_38 [1, 2] : vector<1x16x256xf32> to vector<1xf32>
    %146 = vector.shape_cast %145 : vector<1xf32> to vector<1x1x1xf32>
    %147 = vector.extract %146[0, 0, 0] : f32 from vector<1x1x1xf32>
    %cst_39 = arith.constant 4.096000e+03 : f32
    %148 = arith.divf %147, %cst_39 : f32
    %149 = vector.broadcast %148 : f32 to vector<16x256xf32>
    %150 = arith.subf %143, %149 : vector<16x256xf32>
    %151 = arith.mulf %150, %150 : vector<16x256xf32>
    %152 = vector.shape_cast %151 : vector<16x256xf32> to vector<1x16x256xf32>
    %cst_40 = arith.constant dense<0.000000e+00> : vector<1xf32>
    %153 = vector.multi_reduction <add>, %152, %cst_40 [1, 2] : vector<1x16x256xf32> to vector<1xf32>
    %154 = vector.shape_cast %153 : vector<1xf32> to vector<1x1x1xf32>
    %155 = vector.extract %154[0, 0, 0] : f32 from vector<1x1x1xf32>
    %cst_41 = arith.constant 4.096000e+03 : f32
    %156 = arith.divf %155, %cst_41 : f32
    %157 = vector.broadcast %148 : f32 to vector<16x256xf32>
    %158 = arith.subf %143, %157 : vector<16x256xf32>
    %cst_42 = arith.constant 9.99999974E-6 : f32
    %159 = arith.addf %156, %cst_42 : f32
    %160 = math.rsqrt %159 : f32
    %161 = vector.broadcast %160 : f32 to vector<16x256xf32>
    %162 = arith.mulf %158, %161 : vector<16x256xf32>
    %163 = arith.mulf %162, %2 : vector<16x256xf32>
    %164 = arith.addf %163, %3 : vector<16x256xf32>
    %165 = vector.extract_strided_slice %164 {offsets = [0, 0], sizes = [4, 256], strides = [1, 1]} : vector<16x256xf32> to vector<4x256xf32>
    %166 = arith.negf %165 : vector<4x256xf32>
    %167 = math.exp %166 : vector<4x256xf32>
    %cst_43 = arith.constant 1.000000e+00 : f32
    %168 = vector.broadcast %cst_43 : f32 to vector<4x256xf32>
    %169 = arith.addf %168, %167 : vector<4x256xf32>
    %170 = arith.divf %168, %169 : vector<4x256xf32>
    %171 = vector.extract_strided_slice %164 {offsets = [4, 0], sizes = [4, 256], strides = [1, 1]} : vector<16x256xf32> to vector<4x256xf32>
    %172 = arith.negf %171 : vector<4x256xf32>
    %173 = math.exp %172 : vector<4x256xf32>
    %cst_44 = arith.constant 1.000000e+00 : f32
    %174 = vector.broadcast %cst_44 : f32 to vector<4x256xf32>
    %175 = arith.addf %174, %173 : vector<4x256xf32>
    %176 = arith.divf %174, %175 : vector<4x256xf32>
    %177 = vector.extract_strided_slice %164 {offsets = [8, 0], sizes = [4, 256], strides = [1, 1]} : vector<16x256xf32> to vector<4x256xf32>
    %178 = arith.negf %177 : vector<4x256xf32>
    %179 = math.exp %178 : vector<4x256xf32>
    %cst_45 = arith.constant 1.000000e+00 : f32
    %180 = vector.broadcast %cst_45 : f32 to vector<4x256xf32>
    %181 = arith.addf %180, %179 : vector<4x256xf32>
    %182 = arith.divf %180, %181 : vector<4x256xf32>
    %183 = vector.extract_strided_slice %164 {offsets = [12, 0], sizes = [4, 256], strides = [1, 1]} : vector<16x256xf32> to vector<4x256xf32>
    %184 = math.tanh %183 : vector<4x256xf32>
    %185 = arith.mulf %176, %93 : vector<4x256xf32>
    %186 = arith.mulf %170, %184 : vector<4x256xf32>
    %187 = arith.addf %185, %186 : vector<4x256xf32>
    %188 = math.tanh %187 : vector<4x256xf32>
    %189 = arith.mulf %182, %188 : vector<4x256xf32>
    %190 = arith.addf %189, %103 : vector<4x256xf32>
    %c0_46 = arith.constant 0 : index
    %191 = arith.index_cast %c1_i32_25 : i32 to index
    %c0_47 = arith.constant 0 : index
    %c0_48 = arith.constant 0 : index
    %192 = vector.load %arg7[%c0_46, %191, %c0_47, %c0_48] : memref<1x4x4x256xf32, #tpu.memory_space<vmem>>, vector<1x1x4x256xf32>
    %193 = vector.shape_cast %192 : vector<1x1x4x256xf32> to vector<4x256xf32>
    %194 = vector.shape_cast %190 : vector<4x256xf32> to vector<1x1x4x256xf32>
    tpu.vector_store %arg7[%c0_46, %191, %c0_47, %c0_48], %194 {strides = array<i32>} : memref<1x4x4x256xf32, #tpu.memory_space<vmem>>, vector<1x1x4x256xf32>,
    %c2_i32 = arith.constant 2 : i32
    %c0_49 = arith.constant 0 : index
    %195 = arith.index_cast %c2_i32 : i32 to index
    %c0_50 = arith.constant 0 : index
    %c0_51 = arith.constant 0 : index
    %196 = vector.load %arg1[%c0_49, %195, %c0_50, %c0_51] : memref<1x4x4x256xf32, #tpu.memory_space<vmem>>, vector<1x1x4x256xf32>
    %197 = vector.shape_cast %196 : vector<1x1x4x256xf32> to vector<4x256xf32>
    %198 = tpu.concatenate %197, %190 in 0 : vector<4x256xf32>, vector<4x256xf32> -> vector<8x256xf32>
    %c17_i32_52 = arith.constant 17 : i32
    %199 = tpu.dynamic_rotate %198 by %c17_i32_52 dim 1 : vector<8x256xf32>, i32 -> vector<8x256xf32>
    %200 = vector.extract_strided_slice %4 {offsets = [0, 0], sizes = [1, 256], strides = [1, 1]} : vector<9x256xf32> to vector<1x256xf32>
    %201 = vector.broadcast %200 : vector<1x256xf32> to vector<8x256xf32>
    %202 = arith.mulf %199, %201 : vector<8x256xf32>
    %c16_i32_53 = arith.constant 16 : i32
    %203 = tpu.dynamic_rotate %198 by %c16_i32_53 dim 1 : vector<8x256xf32>, i32 -> vector<8x256xf32>
    %204 = vector.extract_strided_slice %4 {offsets = [1, 0], sizes = [1, 256], strides = [1, 1]} : vector<9x256xf32> to vector<1x256xf32>
    %205 = vector.broadcast %204 : vector<1x256xf32> to vector<8x256xf32>
    %206 = arith.mulf %203, %205 : vector<8x256xf32>
    %c15_i32_54 = arith.constant 15 : i32
    %207 = tpu.dynamic_rotate %198 by %c15_i32_54 dim 1 : vector<8x256xf32>, i32 -> vector<8x256xf32>
    %208 = vector.extract_strided_slice %4 {offsets = [2, 0], sizes = [1, 256], strides = [1, 1]} : vector<9x256xf32> to vector<1x256xf32>
    %209 = vector.broadcast %208 : vector<1x256xf32> to vector<8x256xf32>
    %210 = arith.mulf %207, %209 : vector<8x256xf32>
    %c1_i32_55 = arith.constant 1 : i32
    %211 = tpu.dynamic_rotate %198 by %c1_i32_55 dim 1 : vector<8x256xf32>, i32 -> vector<8x256xf32>
    %212 = vector.extract_strided_slice %4 {offsets = [3, 0], sizes = [1, 256], strides = [1, 1]} : vector<9x256xf32> to vector<1x256xf32>
    %213 = vector.broadcast %212 : vector<1x256xf32> to vector<8x256xf32>
    %214 = arith.mulf %211, %213 : vector<8x256xf32>
    %215 = vector.extract_strided_slice %4 {offsets = [4, 0], sizes = [1, 256], strides = [1, 1]} : vector<9x256xf32> to vector<1x256xf32>
    %216 = vector.broadcast %215 : vector<1x256xf32> to vector<8x256xf32>
    %217 = arith.mulf %198, %216 : vector<8x256xf32>
    %c255_i32_56 = arith.constant 255 : i32
    %218 = tpu.dynamic_rotate %198 by %c255_i32_56 dim 1 : vector<8x256xf32>, i32 -> vector<8x256xf32>
    %219 = vector.extract_strided_slice %4 {offsets = [5, 0], sizes = [1, 256], strides = [1, 1]} : vector<9x256xf32> to vector<1x256xf32>
    %220 = vector.broadcast %219 : vector<1x256xf32> to vector<8x256xf32>
    %221 = arith.mulf %218, %220 : vector<8x256xf32>
    %c241_i32_57 = arith.constant 241 : i32
    %222 = tpu.dynamic_rotate %198 by %c241_i32_57 dim 1 : vector<8x256xf32>, i32 -> vector<8x256xf32>
    %223 = vector.extract_strided_slice %4 {offsets = [6, 0], sizes = [1, 256], strides = [1, 1]} : vector<9x256xf32> to vector<1x256xf32>
    %224 = vector.broadcast %223 : vector<1x256xf32> to vector<8x256xf32>
    %225 = arith.mulf %222, %224 : vector<8x256xf32>
    %c240_i32_58 = arith.constant 240 : i32
    %226 = tpu.dynamic_rotate %198 by %c240_i32_58 dim 1 : vector<8x256xf32>, i32 -> vector<8x256xf32>
    %227 = vector.extract_strided_slice %4 {offsets = [7, 0], sizes = [1, 256], strides = [1, 1]} : vector<9x256xf32> to vector<1x256xf32>
    %228 = vector.broadcast %227 : vector<1x256xf32> to vector<8x256xf32>
    %229 = arith.mulf %226, %228 : vector<8x256xf32>
    %c239_i32_59 = arith.constant 239 : i32
    %230 = tpu.dynamic_rotate %198 by %c239_i32_59 dim 1 : vector<8x256xf32>, i32 -> vector<8x256xf32>
    %231 = vector.extract_strided_slice %4 {offsets = [8, 0], sizes = [1, 256], strides = [1, 1]} : vector<9x256xf32> to vector<1x256xf32>
    %232 = vector.broadcast %231 : vector<1x256xf32> to vector<8x256xf32>
    %233 = arith.mulf %230, %232 : vector<8x256xf32>
    %234 = tpu.concatenate %202, %206, %210, %214, %217, %221, %225, %229, %233 in 0 : vector<8x256xf32>, vector<8x256xf32>, vector<8x256xf32>, vector<8x256xf32>, vector<8x256xf32>, vector<8x256xf32>, vector<8x256xf32>, vector<8x256xf32>, vector<8x256xf32> -> vector<72x256xf32>
    %cst_60 = arith.constant dense<0.000000e+00> : vector<16x256xf32>
    %235 = tpu.matmul %0, %234, %cst_60 {dimension_numbers = #tpu.dot_dimension_numbers<[1], [0], [0], [1], [0, 0, 1, 1], [], []>} : vector<16x72xf32>, vector<72x256xf32>, vector<16x256xf32> -> vector<16x256xf32>
    %236 = vector.broadcast %1 : vector<16x1xf32> to vector<16x256xf32>
    %237 = arith.addf %235, %236 : vector<16x256xf32>
    %238 = vector.shape_cast %237 : vector<16x256xf32> to vector<1x16x256xf32>
    %cst_61 = arith.constant dense<0.000000e+00> : vector<1xf32>
    %239 = vector.multi_reduction <add>, %238, %cst_61 [1, 2] : vector<1x16x256xf32> to vector<1xf32>
    %240 = vector.shape_cast %239 : vector<1xf32> to vector<1x1x1xf32>
    %241 = vector.extract %240[0, 0, 0] : f32 from vector<1x1x1xf32>
    %cst_62 = arith.constant 4.096000e+03 : f32
    %242 = arith.divf %241, %cst_62 : f32
    %243 = vector.broadcast %242 : f32 to vector<16x256xf32>
    %244 = arith.subf %237, %243 : vector<16x256xf32>
    %245 = arith.mulf %244, %244 : vector<16x256xf32>
    %246 = vector.shape_cast %245 : vector<16x256xf32> to vector<1x16x256xf32>
    %cst_63 = arith.constant dense<0.000000e+00> : vector<1xf32>
    %247 = vector.multi_reduction <add>, %246, %cst_63 [1, 2] : vector<1x16x256xf32> to vector<1xf32>
    %248 = vector.shape_cast %247 : vector<1xf32> to vector<1x1x1xf32>
    %249 = vector.extract %248[0, 0, 0] : f32 from vector<1x1x1xf32>
    %cst_64 = arith.constant 4.096000e+03 : f32
    %250 = arith.divf %249, %cst_64 : f32
    %251 = vector.broadcast %242 : f32 to vector<16x256xf32>
    %252 = arith.subf %237, %251 : vector<16x256xf32>
    %cst_65 = arith.constant 9.99999974E-6 : f32
    %253 = arith.addf %250, %cst_65 : f32
    %254 = math.rsqrt %253 : f32
    %255 = vector.broadcast %254 : f32 to vector<16x256xf32>
    %256 = arith.mulf %252, %255 : vector<16x256xf32>
    %257 = arith.mulf %256, %2 : vector<16x256xf32>
    %258 = arith.addf %257, %3 : vector<16x256xf32>
    %259 = vector.extract_strided_slice %258 {offsets = [0, 0], sizes = [4, 256], strides = [1, 1]} : vector<16x256xf32> to vector<4x256xf32>
    %260 = arith.negf %259 : vector<4x256xf32>
    %261 = math.exp %260 : vector<4x256xf32>
    %cst_66 = arith.constant 1.000000e+00 : f32
    %262 = vector.broadcast %cst_66 : f32 to vector<4x256xf32>
    %263 = arith.addf %262, %261 : vector<4x256xf32>
    %264 = arith.divf %262, %263 : vector<4x256xf32>
    %265 = vector.extract_strided_slice %258 {offsets = [4, 0], sizes = [4, 256], strides = [1, 1]} : vector<16x256xf32> to vector<4x256xf32>
    %266 = arith.negf %265 : vector<4x256xf32>
    %267 = math.exp %266 : vector<4x256xf32>
    %cst_67 = arith.constant 1.000000e+00 : f32
    %268 = vector.broadcast %cst_67 : f32 to vector<4x256xf32>
    %269 = arith.addf %268, %267 : vector<4x256xf32>
    %270 = arith.divf %268, %269 : vector<4x256xf32>
    %271 = vector.extract_strided_slice %258 {offsets = [8, 0], sizes = [4, 256], strides = [1, 1]} : vector<16x256xf32> to vector<4x256xf32>
    %272 = arith.negf %271 : vector<4x256xf32>
    %273 = math.exp %272 : vector<4x256xf32>
    %cst_68 = arith.constant 1.000000e+00 : f32
    %274 = vector.broadcast %cst_68 : f32 to vector<4x256xf32>
    %275 = arith.addf %274, %273 : vector<4x256xf32>
    %276 = arith.divf %274, %275 : vector<4x256xf32>
    %277 = vector.extract_strided_slice %258 {offsets = [12, 0], sizes = [4, 256], strides = [1, 1]} : vector<16x256xf32> to vector<4x256xf32>
    %278 = math.tanh %277 : vector<4x256xf32>
    %279 = arith.mulf %270, %187 : vector<4x256xf32>
    %280 = arith.mulf %264, %278 : vector<4x256xf32>
    %281 = arith.addf %279, %280 : vector<4x256xf32>
    %282 = math.tanh %281 : vector<4x256xf32>
    %283 = arith.mulf %276, %282 : vector<4x256xf32>
    %284 = arith.addf %283, %197 : vector<4x256xf32>
    %c0_69 = arith.constant 0 : index
    %285 = arith.index_cast %c2_i32 : i32 to index
    %c0_70 = arith.constant 0 : index
    %c0_71 = arith.constant 0 : index
    %286 = vector.load %arg7[%c0_69, %285, %c0_70, %c0_71] : memref<1x4x4x256xf32, #tpu.memory_space<vmem>>, vector<1x1x4x256xf32>
    %287 = vector.shape_cast %286 : vector<1x1x4x256xf32> to vector<4x256xf32>
    %288 = vector.shape_cast %284 : vector<4x256xf32> to vector<1x1x4x256xf32>
    tpu.vector_store %arg7[%c0_69, %285, %c0_70, %c0_71], %288 {strides = array<i32>} : memref<1x4x4x256xf32, #tpu.memory_space<vmem>>, vector<1x1x4x256xf32>,
    %c3_i32 = arith.constant 3 : i32
    %c0_72 = arith.constant 0 : index
    %289 = arith.index_cast %c3_i32 : i32 to index
    %c0_73 = arith.constant 0 : index
    %c0_74 = arith.constant 0 : index
    %290 = vector.load %arg1[%c0_72, %289, %c0_73, %c0_74] : memref<1x4x4x256xf32, #tpu.memory_space<vmem>>, vector<1x1x4x256xf32>
    %291 = vector.shape_cast %290 : vector<1x1x4x256xf32> to vector<4x256xf32>
    %292 = tpu.concatenate %291, %284 in 0 : vector<4x256xf32>, vector<4x256xf32> -> vector<8x256xf32>
    %c17_i32_75 = arith.constant 17 : i32
    %293 = tpu.dynamic_rotate %292 by %c17_i32_75 dim 1 : vector<8x256xf32>, i32 -> vector<8x256xf32>
    %294 = vector.extract_strided_slice %4 {offsets = [0, 0], sizes = [1, 256], strides = [1, 1]} : vector<9x256xf32> to vector<1x256xf32>
    %295 = vector.broadcast %294 : vector<1x256xf32> to vector<8x256xf32>
    %296 = arith.mulf %293, %295 : vector<8x256xf32>
    %c16_i32_76 = arith.constant 16 : i32
    %297 = tpu.dynamic_rotate %292 by %c16_i32_76 dim 1 : vector<8x256xf32>, i32 -> vector<8x256xf32>
    %298 = vector.extract_strided_slice %4 {offsets = [1, 0], sizes = [1, 256], strides = [1, 1]} : vector<9x256xf32> to vector<1x256xf32>
    %299 = vector.broadcast %298 : vector<1x256xf32> to vector<8x256xf32>
    %300 = arith.mulf %297, %299 : vector<8x256xf32>
    %c15_i32_77 = arith.constant 15 : i32
    %301 = tpu.dynamic_rotate %292 by %c15_i32_77 dim 1 : vector<8x256xf32>, i32 -> vector<8x256xf32>
    %302 = vector.extract_strided_slice %4 {offsets = [2, 0], sizes = [1, 256], strides = [1, 1]} : vector<9x256xf32> to vector<1x256xf32>
    %303 = vector.broadcast %302 : vector<1x256xf32> to vector<8x256xf32>
    %304 = arith.mulf %301, %303 : vector<8x256xf32>
    %c1_i32_78 = arith.constant 1 : i32
    %305 = tpu.dynamic_rotate %292 by %c1_i32_78 dim 1 : vector<8x256xf32>, i32 -> vector<8x256xf32>
    %306 = vector.extract_strided_slice %4 {offsets = [3, 0], sizes = [1, 256], strides = [1, 1]} : vector<9x256xf32> to vector<1x256xf32>
    %307 = vector.broadcast %306 : vector<1x256xf32> to vector<8x256xf32>
    %308 = arith.mulf %305, %307 : vector<8x256xf32>
    %309 = vector.extract_strided_slice %4 {offsets = [4, 0], sizes = [1, 256], strides = [1, 1]} : vector<9x256xf32> to vector<1x256xf32>
    %310 = vector.broadcast %309 : vector<1x256xf32> to vector<8x256xf32>
    %311 = arith.mulf %292, %310 : vector<8x256xf32>
    %c255_i32_79 = arith.constant 255 : i32
    %312 = tpu.dynamic_rotate %292 by %c255_i32_79 dim 1 : vector<8x256xf32>, i32 -> vector<8x256xf32>
    %313 = vector.extract_strided_slice %4 {offsets = [5, 0], sizes = [1, 256], strides = [1, 1]} : vector<9x256xf32> to vector<1x256xf32>
    %314 = vector.broadcast %313 : vector<1x256xf32> to vector<8x256xf32>
    %315 = arith.mulf %312, %314 : vector<8x256xf32>
    %c241_i32_80 = arith.constant 241 : i32
    %316 = tpu.dynamic_rotate %292 by %c241_i32_80 dim 1 : vector<8x256xf32>, i32 -> vector<8x256xf32>
    %317 = vector.extract_strided_slice %4 {offsets = [6, 0], sizes = [1, 256], strides = [1, 1]} : vector<9x256xf32> to vector<1x256xf32>
    %318 = vector.broadcast %317 : vector<1x256xf32> to vector<8x256xf32>
    %319 = arith.mulf %316, %318 : vector<8x256xf32>
    %c240_i32_81 = arith.constant 240 : i32
    %320 = tpu.dynamic_rotate %292 by %c240_i32_81 dim 1 : vector<8x256xf32>, i32 -> vector<8x256xf32>
    %321 = vector.extract_strided_slice %4 {offsets = [7, 0], sizes = [1, 256], strides = [1, 1]} : vector<9x256xf32> to vector<1x256xf32>
    %322 = vector.broadcast %321 : vector<1x256xf32> to vector<8x256xf32>
    %323 = arith.mulf %320, %322 : vector<8x256xf32>
    %c239_i32_82 = arith.constant 239 : i32
    %324 = tpu.dynamic_rotate %292 by %c239_i32_82 dim 1 : vector<8x256xf32>, i32 -> vector<8x256xf32>
    %325 = vector.extract_strided_slice %4 {offsets = [8, 0], sizes = [1, 256], strides = [1, 1]} : vector<9x256xf32> to vector<1x256xf32>
    %326 = vector.broadcast %325 : vector<1x256xf32> to vector<8x256xf32>
    %327 = arith.mulf %324, %326 : vector<8x256xf32>
    %328 = tpu.concatenate %296, %300, %304, %308, %311, %315, %319, %323, %327 in 0 : vector<8x256xf32>, vector<8x256xf32>, vector<8x256xf32>, vector<8x256xf32>, vector<8x256xf32>, vector<8x256xf32>, vector<8x256xf32>, vector<8x256xf32>, vector<8x256xf32> -> vector<72x256xf32>
    %cst_83 = arith.constant dense<0.000000e+00> : vector<16x256xf32>
    %329 = tpu.matmul %0, %328, %cst_83 {dimension_numbers = #tpu.dot_dimension_numbers<[1], [0], [0], [1], [0, 0, 1, 1], [], []>} : vector<16x72xf32>, vector<72x256xf32>, vector<16x256xf32> -> vector<16x256xf32>
    %330 = vector.broadcast %1 : vector<16x1xf32> to vector<16x256xf32>
    %331 = arith.addf %329, %330 : vector<16x256xf32>
    %332 = vector.shape_cast %331 : vector<16x256xf32> to vector<1x16x256xf32>
    %cst_84 = arith.constant dense<0.000000e+00> : vector<1xf32>
    %333 = vector.multi_reduction <add>, %332, %cst_84 [1, 2] : vector<1x16x256xf32> to vector<1xf32>
    %334 = vector.shape_cast %333 : vector<1xf32> to vector<1x1x1xf32>
    %335 = vector.extract %334[0, 0, 0] : f32 from vector<1x1x1xf32>
    %cst_85 = arith.constant 4.096000e+03 : f32
    %336 = arith.divf %335, %cst_85 : f32
    %337 = vector.broadcast %336 : f32 to vector<16x256xf32>
    %338 = arith.subf %331, %337 : vector<16x256xf32>
    %339 = arith.mulf %338, %338 : vector<16x256xf32>
    %340 = vector.shape_cast %339 : vector<16x256xf32> to vector<1x16x256xf32>
    %cst_86 = arith.constant dense<0.000000e+00> : vector<1xf32>
    %341 = vector.multi_reduction <add>, %340, %cst_86 [1, 2] : vector<1x16x256xf32> to vector<1xf32>
    %342 = vector.shape_cast %341 : vector<1xf32> to vector<1x1x1xf32>
    %343 = vector.extract %342[0, 0, 0] : f32 from vector<1x1x1xf32>
    %cst_87 = arith.constant 4.096000e+03 : f32
    %344 = arith.divf %343, %cst_87 : f32
    %345 = vector.broadcast %336 : f32 to vector<16x256xf32>
    %346 = arith.subf %331, %345 : vector<16x256xf32>
    %cst_88 = arith.constant 9.99999974E-6 : f32
    %347 = arith.addf %344, %cst_88 : f32
    %348 = math.rsqrt %347 : f32
    %349 = vector.broadcast %348 : f32 to vector<16x256xf32>
    %350 = arith.mulf %346, %349 : vector<16x256xf32>
    %351 = arith.mulf %350, %2 : vector<16x256xf32>
    %352 = arith.addf %351, %3 : vector<16x256xf32>
    %353 = vector.extract_strided_slice %352 {offsets = [0, 0], sizes = [4, 256], strides = [1, 1]} : vector<16x256xf32> to vector<4x256xf32>
    %354 = arith.negf %353 : vector<4x256xf32>
    %355 = math.exp %354 : vector<4x256xf32>
    %cst_89 = arith.constant 1.000000e+00 : f32
    %356 = vector.broadcast %cst_89 : f32 to vector<4x256xf32>
    %357 = arith.addf %356, %355 : vector<4x256xf32>
    %358 = arith.divf %356, %357 : vector<4x256xf32>
    %359 = vector.extract_strided_slice %352 {offsets = [4, 0], sizes = [4, 256], strides = [1, 1]} : vector<16x256xf32> to vector<4x256xf32>
    %360 = arith.negf %359 : vector<4x256xf32>
    %361 = math.exp %360 : vector<4x256xf32>
    %cst_90 = arith.constant 1.000000e+00 : f32
    %362 = vector.broadcast %cst_90 : f32 to vector<4x256xf32>
    %363 = arith.addf %362, %361 : vector<4x256xf32>
    %364 = arith.divf %362, %363 : vector<4x256xf32>
    %365 = vector.extract_strided_slice %352 {offsets = [8, 0], sizes = [4, 256], strides = [1, 1]} : vector<16x256xf32> to vector<4x256xf32>
    %366 = arith.negf %365 : vector<4x256xf32>
    %367 = math.exp %366 : vector<4x256xf32>
    %cst_91 = arith.constant 1.000000e+00 : f32
    %368 = vector.broadcast %cst_91 : f32 to vector<4x256xf32>
    %369 = arith.addf %368, %367 : vector<4x256xf32>
    %370 = arith.divf %368, %369 : vector<4x256xf32>
    %371 = vector.extract_strided_slice %352 {offsets = [12, 0], sizes = [4, 256], strides = [1, 1]} : vector<16x256xf32> to vector<4x256xf32>
    %372 = math.tanh %371 : vector<4x256xf32>
    %373 = arith.mulf %364, %281 : vector<4x256xf32>
    %374 = arith.mulf %358, %372 : vector<4x256xf32>
    %375 = arith.addf %373, %374 : vector<4x256xf32>
    %376 = math.tanh %375 : vector<4x256xf32>
    %377 = arith.mulf %370, %376 : vector<4x256xf32>
    %378 = arith.addf %377, %291 : vector<4x256xf32>
    %c0_92 = arith.constant 0 : index
    %379 = arith.index_cast %c3_i32 : i32 to index
    %c0_93 = arith.constant 0 : index
    %c0_94 = arith.constant 0 : index
    %380 = vector.load %arg7[%c0_92, %379, %c0_93, %c0_94] : memref<1x4x4x256xf32, #tpu.memory_space<vmem>>, vector<1x1x4x256xf32>
    %381 = vector.shape_cast %380 : vector<1x1x4x256xf32> to vector<4x256xf32>
    %382 = vector.shape_cast %378 : vector<4x256xf32> to vector<1x1x4x256xf32>
    tpu.vector_store %arg7[%c0_92, %379, %c0_93, %c0_94], %382 {strides = array<i32>} : memref<1x4x4x256xf32, #tpu.memory_space<vmem>>, vector<1x1x4x256xf32>,
    %c4_i32 = arith.constant 4 : i32
    %c0_95 = arith.constant 0 : index
    %c0_96 = arith.constant 0 : index
    %c0_97 = arith.constant 0 : index
    %383 = vector.load %arg8[%c0_95, %c0_96, %c0_97] : memref<1x4x256xf32, #tpu.memory_space<vmem>>, vector<1x4x256xf32>
    %384 = vector.shape_cast %383 : vector<1x4x256xf32> to vector<4x256xf32>
    %385 = vector.shape_cast %378 : vector<4x256xf32> to vector<1x4x256xf32>
    tpu.vector_store %arg8[%c0_95, %c0_96, %c0_97], %385 {strides = array<i32>} : memref<1x4x256xf32, #tpu.memory_space<vmem>>, vector<1x4x256xf32>,
    %c0_98 = arith.constant 0 : index
    %c0_99 = arith.constant 0 : index
    %c0_100 = arith.constant 0 : index
    %386 = vector.load %arg9[%c0_98, %c0_99, %c0_100] : memref<1x4x256xf32, #tpu.memory_space<vmem>>, vector<1x4x256xf32>
    %387 = vector.shape_cast %386 : vector<1x4x256xf32> to vector<4x256xf32>
    %388 = vector.shape_cast %375 : vector<4x256xf32> to vector<1x4x256xf32>
    tpu.vector_store %arg9[%c0_98, %c0_99, %c0_100], %388 {strides = array<i32>} : memref<1x4x256xf32, #tpu.memory_space<vmem>>, vector<1x4x256xf32>,
    return
  }
  func.func @transform_0(%arg0: i32) -> (i32, i32, i32, i32) {
    %c0_i32 = arith.constant 0 : i32
    %c0_i32_0 = arith.constant 0 : i32
    %c0_i32_1 = arith.constant 0 : i32
    %c0_i32_2 = arith.constant 0 : i32
    return %arg0, %c0_i32, %c0_i32_0, %c0_i32_1 : i32, i32, i32, i32
  }
  func.func @transform_1(%arg0: i32) -> (i32, i32) {
    %c0_i32 = arith.constant 0 : i32
    %c0_i32_0 = arith.constant 0 : i32
    %c0_i32_1 = arith.constant 0 : i32
    return %c0_i32, %c0_i32_0 : i32, i32
  }
  func.func @transform_2(%arg0: i32) -> (i32, i32) {
    %c0_i32 = arith.constant 0 : i32
    %c0_i32_0 = arith.constant 0 : i32
    %c0_i32_1 = arith.constant 0 : i32
    return %c0_i32, %c0_i32_0 : i32, i32
  }
  func.func @transform_3(%arg0: i32) -> (i32, i32) {
    %c0_i32 = arith.constant 0 : i32
    %c0_i32_0 = arith.constant 0 : i32
    %c0_i32_1 = arith.constant 0 : i32
    return %c0_i32, %c0_i32_0 : i32, i32
  }
  func.func @transform_4(%arg0: i32) -> (i32, i32) {
    %c0_i32 = arith.constant 0 : i32
    %c0_i32_0 = arith.constant 0 : i32
    %c0_i32_1 = arith.constant 0 : i32
    return %c0_i32, %c0_i32_0 : i32, i32
  }
  func.func @transform_5(%arg0: i32) -> (i32, i32) {
    %c0_i32 = arith.constant 0 : i32
    %c0_i32_0 = arith.constant 0 : i32
    %c0_i32_1 = arith.constant 0 : i32
    return %c0_i32, %c0_i32_0 : i32, i32
  }
  func.func @transform_6(%arg0: i32) -> (i32, i32, i32, i32) {
    %c0_i32 = arith.constant 0 : i32
    %c0_i32_0 = arith.constant 0 : i32
    %c0_i32_1 = arith.constant 0 : i32
    %c0_i32_2 = arith.constant 0 : i32
    return %arg0, %c0_i32, %c0_i32_0, %c0_i32_1 : i32, i32, i32, i32
  }
  func.func @transform_7(%arg0: i32) -> (i32, i32, i32) {
    %c0_i32 = arith.constant 0 : i32
    %c0_i32_0 = arith.constant 0 : i32
    %c0_i32_1 = arith.constant 0 : i32
    return %arg0, %c0_i32, %c0_i32_0 : i32, i32, i32
  }
  func.func @transform_8(%arg0: i32) -> (i32, i32, i32) {
    %c0_i32 = arith.constant 0 : i32
    %c0_i32_0 = arith.constant 0 : i32
    %c0_i32_1 = arith.constant 0 : i32
    return %arg0, %c0_i32, %c0_i32_0 : i32, i32, i32
  }
}

</mosaic_0001>

<llo_original>
// kernel: tpu_custom_call.1
$region0: #{tpu_custom_call.1}
  #allocation0 [shape = 'u32[]', space=smem, size = 0x4, offset = 0x4, fixed_abs, tag = 'smem constant byte address 0x4 - core index']
  #allocation1 [shape = 'u32[144,128]{1,0:T(1,128)}', space=vmem, size = 0x12000, scoped, tag = 'internal scratch']
  %s0 = inlined_call_operand.hbm [shape: f32[2,4,4,256], index: 0, kind: input, shape index: {}]
  %s1 = inlined_call_operand.hbm [shape: f32[16,72], index: 1, kind: input, shape index: {}]
  %s2 = inlined_call_operand.vmem [shape: f32[16,1], index: 2, kind: input, shape index: {}]
  %s3 = inlined_call_operand.hbm [shape: f32[16,256], index: 3, kind: input, shape index: {}]
  %s4 = inlined_call_operand.vmem [shape: f32[16,256], index: 4, kind: input, shape index: {}]
  %s5 = inlined_call_operand.hbm [shape: f32[9,256], index: 5, kind: input, shape index: {}]
  %s6 = inlined_call_operand.hbm [shape: f32[2,4,4,256], index: 6, kind: output, shape index: {0}]
  %s7 = inlined_call_operand.hbm [shape: f32[2,4,256], index: 7, kind: output, shape index: {1}]
  %s8 = inlined_call_operand.hbm [shape: f32[2,4,256], index: 8, kind: output, shape index: {2}]
  %9 = xla_tuple %s6, %s7, %s8
  %s10 = sld [smem:[#allocation0]]
  $region89: #{tpu_custom_call.1} parent=0
    _
  %s12 = ssub.s32 1, %s10
  %s13 = scalar_select 0, %s12, %s10
  $region1: #{tpu_custom_call.1} parent=0
    #allocation2 [shape = 'u8[32768]{0}', space=vmem, size = 0x8000, scoped, tag = 'input window, operand 0']
    #allocation3 [shape = 's32[2]{0}', space=sflag, size = 0x8, scoped, tag = 'scoped memory for tpu_custom_call.1']
    #allocation4 [shape = 's32[2]{0}', space=sflag, size = 0x8, scoped, tag = 'scoped memory for tpu_custom_call.1']
    #allocation5 [shape = 'u8[8192]{0}', space=vmem, size = 0x2000, scoped, tag = 'input window, operand 1, single buffered']
    #allocation6 [shape = 's32[1]{0}', space=sflag, size = 0x4, scoped, tag = 'scoped memory for tpu_custom_call.1']
    #allocation7 [shape = 'u8[16384]{0}', space=vmem, size = 0x4000, scoped, tag = 'input window, operand 3, single buffered']
    #allocation8 [shape = 'u8[16384]{0}', space=vmem, size = 0x4000, scoped, tag = 'input window, operand 5, single buffered']
    #allocation9 [shape = 's32[1]{0}', space=sflag, size = 0x4, scoped, tag = 'scoped memory for tpu_custom_call.1']
    #allocation10 [shape = 'u8[32768]{0}', space=vmem, size = 0x8000, scoped, tag = 'output window, operand 0']
    #allocation11 [shape = 'u8[8192]{0}', space=vmem, size = 0x2000, scoped, tag = 'output window, operand 1']
    #allocation12 [shape = 's32[2]{0}', space=sflag, size = 0x8, scoped, tag = 'scoped memory for tpu_custom_call.1']
    #allocation13 [shape = 'u8[8192]{0}', space=vmem, size = 0x2000, scoped, tag = 'output window, operand 2']
    %14 = vsyncpa [#allocation3], 0
    %s15 = scalar_lea.sflag [#allocation3], 1
    %16 = vsyncpa %s15, 0
    %17 = vsyncpa [#allocation6], 0
    %18 = vsyncpa [#allocation9], 0
    %19 = vsyncpa [#allocation4], 0
    %s20 = scalar_lea.sflag [#allocation4], 1
    %21 = vsyncpa %s20, 0
    %22 = vsyncpa [#allocation12], 0
    %s23 = scalar_lea.sflag [#allocation12], 1
    %24 = vsyncpa %s23, 0
    loop: start=0, step=1, limit=4
    $region2: #{tpu_custom_call.1} parent=1 // loop_pre_header
      _
    $region3: #{tpu_custom_call.1} parent=1 // loop_header
      %s26 = sphi 0, %s30
      %p27 = scmp.ge.s32.totalorder %s26, 4
      %s36 = sphi 0, %s38
      %s39 = sphi 0, %s36
      %s40 = sphi 0, %s39
      %s56 = sphi 0, %s40
      %s60 = sphi 0, %s60
      %s62 = sphi 0, %s60
      %s63 = sphi 0, %s62
      %s77 = sphi 0, %s63
      %s81 = sphi 0, %s81
      %s83 = sphi 0, %s81
      %s84 = sphi 0, %s83
      %s98 = sphi 0, %s84
      %s102 = sphi 0, %s102
      %s104 = sphi 0, %s102
      %s105 = sphi 0, %s104
      %s119 = sphi 0, %s105
      %s123 = sphi 0, %s123
      %s125 = sphi 0, %s123
      %s126 = sphi 0, %s125
      %s140 = sphi 0, %s126
      %s144 = sphi 0, %s144
      %s146 = sphi 0, %s144
      %s147 = sphi 0, %s146
      %s161 = sphi 0, %s147
      %s167 = sphi 0, %s169
      %s170 = sphi 0, %s167
      %s171 = sphi 0, %s170
      %s187 = sphi 0, %s171
      %s193 = sphi 0, %s195
      %s196 = sphi 0, %s193
      %s197 = sphi 0, %s196
      %s213 = sphi 0, %s197
      %s219 = sphi 0, %s221
      %s222 = sphi 0, %s219
      %s223 = sphi 0, %s222
      %s239 = sphi 0, %s223
    $region4: #{tpu_custom_call.1} parent=1 // loop_header_branch
      %29 = sbr.rel (%p27) target = $region8
    $region5: #{tpu_custom_call.1} parent=1 // loop_body
      %s31 = ssub.s32 %s26, 1
      %s32 = ssub.s32 %s26, 2
      %s33 = sadd.s32 %s26, 1
      %s34 = ssub.s32 %s26, %s33
      %p35 = scmp.eq.s32.totalorder %s34, 0
      %s37 = sadd.s32 %s36, 1
      %s38 = scalar_select %p35, %s36, %s37
      %p41 = pneg %p35
      %p42 = scmp.eq.s32.totalorder %s26, 1
      %p43 = por %p41, %p42
      %p44 = scmp.ne.s32.totalorder %s36, %s39
      %p45 = scmp.eq.s32.totalorder %s26, 0
      %p46 = por %p44, %p45
      %p47 = scmp.ne.s32.totalorder %s36, %s39
      %p48 = scmp.eq.s32.totalorder %s31, 1
      %p49 = por %p47, %p48
      %p50 = scmp.ne.s32.totalorder %s39, %s40
      %p51 = scmp.eq.s32.totalorder %s31, 0
      %p52 = por %p50, %p51
      %p53 = scmp.ne.s32.totalorder %s39, %s40
      %p54 = scmp.eq.s32.totalorder %s32, 1
      %p55 = por %p53, %p54
      %p57 = scmp.ne.s32.totalorder %s40, %s56
      %p58 = scmp.eq.s32.totalorder %s32, 0
      %p59 = por %p57, %p58
      %s61 = sadd.s32 %s60, 1
      %p64 = scmp.eq.s32.totalorder %s26, 1
      %p65 = scmp.ne.s32.totalorder %s60, %s62
      %p66 = scmp.eq.s32.totalorder %s26, 0
      %p67 = por %p65, %p66
      %p68 = scmp.ne.s32.totalorder %s60, %s62
      %p69 = scmp.eq.s32.totalorder %s31, 1
      %p70 = por %p68, %p69
      %p71 = scmp.ne.s32.totalorder %s62, %s63
      %p72 = scmp.eq.s32.totalorder %s31, 0
      %p73 = por %p71, %p72
      %p74 = scmp.ne.s32.totalorder %s62, %s63
      %p75 = scmp.eq.s32.totalorder %s32, 1
      %p76 = por %p74, %p75
      %p78 = scmp.ne.s32.totalorder %s63, %s77
      %p79 = scmp.eq.s32.totalorder %s32, 0
      %p80 = por %p78, %p79
      %s82 = sadd.s32 %s81, 1
      %p85 = scmp.eq.s32.totalorder %s26, 1
      %p86 = scmp.ne.s32.totalorder %s81, %s83
      %p87 = scmp.eq.s32.totalorder %s26, 0
      %p88 = por %p86, %p87
      %p89 = scmp.ne.s32.totalorder %s81, %s83
      %p90 = scmp.eq.s32.totalorder %s31, 1
      %p91 = por %p89, %p90
      %p92 = scmp.ne.s32.totalorder %s83, %s84
      %p93 = scmp.eq.s32.totalorder %s31, 0
      %p94 = por %p92, %p93
      %p95 = scmp.ne.s32.totalorder %s83, %s84
      %p96 = scmp.eq.s32.totalorder %s32, 1
      %p97 = por %p95, %p96
      %p99 = scmp.ne.s32.totalorder %s84, %s98
      %p100 = scmp.eq.s32.totalorder %s32, 0
      %p101 = por %p99, %p100
      %s103 = sadd.s32 %s102, 1
      %p106 = scmp.eq.s32.totalorder %s26, 1
      %p107 = scmp.ne.s32.totalorder %s102, %s104
      %p108 = scmp.eq.s32.totalorder %s26, 0
      %p109 = por %p107, %p108
      %p110 = scmp.ne.s32.totalorder %s102, %s104
      %p111 = scmp.eq.s32.totalorder %s31, 1
      %p112 = por %p110, %p111
      %p113 = scmp.ne.s32.totalorder %s104, %s105
      %p114 = scmp.eq.s32.totalorder %s31, 0
      %p115 = por %p113, %p114
      %p116 = scmp.ne.s32.totalorder %s104, %s105
      %p117 = scmp.eq.s32.totalorder %s32, 1
      %p118 = por %p116, %p117
      %p120 = scmp.ne.s32.totalorder %s105, %s119
      %p121 = scmp.eq.s32.totalorder %s32, 0
      %p122 = por %p120, %p121
      %s124 = sadd.s32 %s123, 1
      %p127 = scmp.eq.s32.totalorder %s26, 1
      %p128 = scmp.ne.s32.totalorder %s123, %s125
      %p129 = scmp.eq.s32.totalorder %s26, 0
      %p130 = por %p128, %p129
      %p131 = scmp.ne.s32.totalorder %s123, %s125
      %p132 = scmp.eq.s32.totalorder %s31, 1
      %p133 = por %p131, %p132
      %p134 = scmp.ne.s32.totalorder %s125, %s126
      %p135 = scmp.eq.s32.totalorder %s31, 0
      %p136 = por %p134, %p135
      %p137 = scmp.ne.s32.totalorder %s125, %s126
      %p138 = scmp.eq.s32.totalorder %s32, 1
      %p139 = por %p137, %p138
      %p141 = scmp.ne.s32.totalorder %s126, %s140
      %p142 = scmp.eq.s32.totalorder %s32, 0
      %p143 = por %p141, %p142
      %s145 = sadd.s32 %s144, 1
      %p148 = scmp.eq.s32.totalorder %s26, 1
      %p149 = scmp.ne.s32.totalorder %s144, %s146
      %p150 = scmp.eq.s32.totalorder %s26, 0
      %p151 = por %p149, %p150
      %p152 = scmp.ne.s32.totalorder %s144, %s146
      %p153 = scmp.eq.s32.totalorder %s31, 1
      %p154 = por %p152, %p153
      %p155 = scmp.ne.s32.totalorder %s146, %s147
      %p156 = scmp.eq.s32.totalorder %s31, 0
      %p157 = por %p155, %p156
      %p158 = scmp.ne.s32.totalorder %s146, %s147
      %p159 = scmp.eq.s32.totalorder %s32, 1
      %p160 = por %p158, %p159
      %p162 = scmp.ne.s32.totalorder %s147, %s161
      %p163 = scmp.eq.s32.totalorder %s32, 0
      %p164 = por %p162, %p163
      %s165 = ssub.s32 %s26, %s33
      %p166 = scmp.eq.s32.totalorder %s165, 0
      %s168 = sadd.s32 %s167, 1
      %s169 = scalar_select %p166, %s167, %s168
      %p172 = pneg %p166
      %p173 = scmp.eq.s32.totalorder %s26, 1
      %p174 = por %p172, %p173
      %p175 = scmp.ne.s32.totalorder %s167, %s170
      %p176 = scmp.eq.s32.totalorder %s26, 0
      %p177 = por %p175, %p176
      %p178 = scmp.ne.s32.totalorder %s167, %s170
      %p179 = scmp.eq.s32.totalorder %s31, 1
      %p180 = por %p178, %p179
      %p181 = scmp.ne.s32.totalorder %s170, %s171
      %p182 = scmp.eq.s32.totalorder %s31, 0
      %p183 = por %p181, %p182
      %p184 = scmp.ne.s32.totalorder %s170, %s171
      %p185 = scmp.eq.s32.totalorder %s32, 1
      %p186 = por %p184, %p185
      %p188 = scmp.ne.s32.totalorder %s171, %s187
      %p189 = scmp.eq.s32.totalorder %s32, 0
      %p190 = por %p188, %p189
      %s191 = ssub.s32 %s26, %s33
      %p192 = scmp.eq.s32.totalorder %s191, 0
      %s194 = sadd.s32 %s193, 1
      %s195 = scalar_select %p192, %s193, %s194
      %p198 = pneg %p192
      %p199 = scmp.eq.s32.totalorder %s26, 1
      %p200 = por %p198, %p199
      %p201 = scmp.ne.s32.totalorder %s193, %s196
      %p202 = scmp.eq.s32.totalorder %s26, 0
      %p203 = por %p201, %p202
      %p204 = scmp.ne.s32.totalorder %s193, %s196
      %p205 = scmp.eq.s32.totalorder %s31, 1
      %p206 = por %p204, %p205
      %p207 = scmp.ne.s32.totalorder %s196, %s197
      %p208 = scmp.eq.s32.totalorder %s31, 0
      %p209 = por %p207, %p208
      %p210 = scmp.ne.s32.totalorder %s196, %s197
      %p211 = scmp.eq.s32.totalorder %s32, 1
      %p212 = por %p210, %p211
      %p214 = scmp.ne.s32.totalorder %s197, %s213
      %p215 = scmp.eq.s32.totalorder %s32, 0
      %p216 = por %p214, %p215
      %s217 = ssub.s32 %s26, %s33
      %p218 = scmp.eq.s32.totalorder %s217, 0
      %s220 = sadd.s32 %s219, 1
      %s221 = scalar_select %p218, %s219, %s220
      %p224 = pneg %p218
      %p225 = scmp.eq.s32.totalorder %s26, 1
      %p226 = por %p224, %p225
      %p227 = scmp.ne.s32.totalorder %s219, %s222
      %p228 = scmp.eq.s32.totalorder %s26, 0
      %p229 = por %p227, %p228
      %p230 = scmp.ne.s32.totalorder %s219, %s222
      %p231 = scmp.eq.s32.totalorder %s31, 1
      %p232 = por %p230, %p231
      %p233 = scmp.ne.s32.totalorder %s222, %s223
      %p234 = scmp.eq.s32.totalorder %s31, 0
      %p235 = por %p233, %p234
      %p236 = scmp.ne.s32.totalorder %s222, %s223
      %p237 = scmp.eq.s32.totalorder %s32, 1
      %p238 = por %p236, %p237
      %p240 = scmp.ne.s32.totalorder %s223, %s239
      %p241 = scmp.eq.s32.totalorder %s32, 0
      %p242 = por %p240, %p241
      %p243 = scmp.le.s32.totalorder 1, %s26
      %p244 = scmp.lt.s32.totalorder %s26, 3
      %p245 = pnand %p243, %p244
      %p246 = pneg %p245
      // Predicated region
      $region9: #{tpu_custom_call.1} parent=5 // pred_check
        _
      $region10: #{tpu_custom_call.1} parent=5 // pred_check_branch
        %248 = sbr.rel (%p245) target = $region12
      $region11: #{tpu_custom_call.1} parent=5 // pred_region
        %s249 = ssub.s32 %s26, 1
        // Predicated region
        $region13: #{tpu_custom_call.1} parent=11 // pred_check
          %p250 = pneg %p73
        $region14: #{tpu_custom_call.1} parent=11 // pred_check_branch
          %252 = sbr.rel (%p250) target = $region16
        $region15: #{tpu_custom_call.1} parent=11 // pred_region
          %s254 = ssub.s32 256, 256
          %255 = vsyncadd [#allocation6], %s254
          %s256 = sshll.u32 [#allocation5], 4
          %s257 = int_to_ptr.vmem [resolvable:$true] %s256
          %262 = dma.hbm_to_vmem [thread:$0]  %s1, 256, %s257, [#allocation6], 128, 128, 8
        $region16: #{tpu_custom_call.1} parent=11 // pred_fallthru
          _
        // Predicated region
        $region17: #{tpu_custom_call.1} parent=11 // pred_check
          %p263 = pneg %p94
        $region18: #{tpu_custom_call.1} parent=11 // pred_check_branch
          %265 = sbr.rel (%p263) target = $region20
        $region19: #{tpu_custom_call.1} parent=11 // pred_region
          _
        $region20: #{tpu_custom_call.1} parent=11 // pred_fallthru
          _
        // Predicated region
        $region21: #{tpu_custom_call.1} parent=11 // pred_check
          %p266 = pneg %p115
        $region22: #{tpu_custom_call.1} parent=11 // pred_check_branch
          %268 = sbr.rel (%p266) target = $region24
        $region23: #{tpu_custom_call.1} parent=11 // pred_region
          %s270 = ssub.s32 512, 512
          %271 = vsyncadd [#allocation6], %s270
          %s272 = sshll.u32 [#allocation7], 4
          %s273 = int_to_ptr.vmem [resolvable:$true] %s272
          %278 = dma.hbm_to_vmem [thread:$0]  %s3, 512, %s273, [#allocation6], 256, 256, 16
        $region24: #{tpu_custom_call.1} parent=11 // pred_fallthru
          _
        // Predicated region
        $region25: #{tpu_custom_call.1} parent=11 // pred_check
          %p279 = pneg %p136
        $region26: #{tpu_custom_call.1} parent=11 // pred_check_branch
          %281 = sbr.rel (%p279) target = $region28
        $region27: #{tpu_custom_call.1} parent=11 // pred_region
          _
        $region28: #{tpu_custom_call.1} parent=11 // pred_fallthru
          _
        // Predicated region
        $region29: #{tpu_custom_call.1} parent=11 // pred_check
          %p282 = pneg %p157
        $region30: #{tpu_custom_call.1} parent=11 // pred_check_branch
          %284 = sbr.rel (%p282) target = $region32
        $region31: #{tpu_custom_call.1} parent=11 // pred_region
          %s286 = ssub.s32 512, 512
          %287 = vsyncadd [#allocation9], %s286
          %s288 = sshll.u32 [#allocation8], 4
          %s289 = int_to_ptr.vmem [resolvable:$true] %s288
          %294 = dma.hbm_to_vmem [thread:$0]  %s5, 512, %s289, [#allocation9], 256, 256, 16
        $region32: #{tpu_custom_call.1} parent=11 // pred_fallthru
          _
      $region12: #{tpu_custom_call.1} parent=5 // pred_fallthru
        _
      %p295 = scmp.lt.s32.totalorder %s26, 2
      // Predicated region
      $region33: #{tpu_custom_call.1} parent=5 // pred_check
        %p296 = pneg %p295
      $region34: #{tpu_custom_call.1} parent=5 // pred_check_branch
        %298 = sbr.rel (%p296) target = $region36
      $region35: #{tpu_custom_call.1} parent=5 // pred_region
        // Predicated region
        $region37: #{tpu_custom_call.1} parent=35 // pred_check
          %p299 = pneg %p46
        $region38: #{tpu_custom_call.1} parent=35 // pred_check_branch
          %301 = sbr.rel (%p299) target = $region40
        $region39: #{tpu_custom_call.1} parent=35 // pred_region
          %s302 = sand.u32 %s36, 1
          %s303 = scalar_lea.sflag [#allocation3], %s302
          %s304 = sand.u32 %s36, 1
          %s305 = smul.addr %s304, 32
          %s306 = scalar_lea.vmem [#allocation2], %s305
          %s308 = ssub.s32 512, 512
          %309 = vsyncadd %s303, %s308
          %s310 = smul.addr %s26, 8
          %s311 = smul.addr %s310, 64
          %s312 = scalar_lea.hbm %s0, %s311
          %s313 = sshll.u32 %s306, 4
          %s314 = int_to_ptr.vmem [resolvable:$true] %s313
          %319 = dma.hbm_to_vmem [thread:$0]  %s312, 512, %s314, %s303, 128, 128, 8
        $region40: #{tpu_custom_call.1} parent=35 // pred_fallthru
          _
      $region36: #{tpu_custom_call.1} parent=5 // pred_fallthru
        _
      %p320 = scmp.le.s32.totalorder 1, %s26
      %p321 = scmp.lt.s32.totalorder %s26, 3
      %p322 = pnand %p320, %p321
      %p323 = pneg %p322
      // Predicated region
      $region41: #{tpu_custom_call.1} parent=5 // pred_check
        _
      $region42: #{tpu_custom_call.1} parent=5 // pred_check_branch
        %325 = sbr.rel (%p322) target = $region44
      $region43: #{tpu_custom_call.1} parent=5 // pred_region
        %s326 = ssub.s32 %s26, 1
        %s327 = sand.u32 %s39, 1
        %s328 = scalar_lea.sflag [#allocation3], %s327
        %s329 = sand.u32 %s39, 1
        %s330 = smul.addr %s329, 32
        %s331 = scalar_lea.vmem [#allocation2], %s330
        // Predicated region
        $region45: #{tpu_custom_call.1} parent=43 // pred_check
          %p332 = pneg %p52
        $region46: #{tpu_custom_call.1} parent=43 // pred_check_branch
          %334 = sbr.rel (%p332) target = $region48
        $region47: #{tpu_custom_call.1} parent=43 // pred_region
          %335 = dma.done %s328, 512
        $region48: #{tpu_custom_call.1} parent=43 // pred_fallthru
          _
        // Predicated region
        $region49: #{tpu_custom_call.1} parent=43 // pred_check
          %p336 = pneg %p73
        $region50: #{tpu_custom_call.1} parent=43 // pred_check_branch
          %338 = sbr.rel (%p336) target = $region52
        $region51: #{tpu_custom_call.1} parent=43 // pred_region
          %339 = dma.done [#allocation6], 256
        $region52: #{tpu_custom_call.1} parent=43 // pred_fallthru
          _
        // Predicated region
        $region53: #{tpu_custom_call.1} parent=43 // pred_check
          %p340 = pneg %p115
        $region54: #{tpu_custom_call.1} parent=43 // pred_check_branch
          %342 = sbr.rel (%p340) target = $region56
        $region55: #{tpu_custom_call.1} parent=43 // pred_region
          %343 = dma.done [#allocation6], 512
        $region56: #{tpu_custom_call.1} parent=43 // pred_fallthru
          _
        // Predicated region
        $region57: #{tpu_custom_call.1} parent=43 // pred_check
          %p344 = pneg %p157
        $region58: #{tpu_custom_call.1} parent=43 // pred_check_branch
          %346 = sbr.rel (%p344) target = $region60
        $region59: #{tpu_custom_call.1} parent=43 // pred_region
          %347 = dma.done [#allocation9], 512
        $region60: #{tpu_custom_call.1} parent=43 // pred_fallthru
          _
        %s348 = sand.u32 %s39, 1
        %s349 = scalar_lea.sflag [#allocation3], %s348
        %s350 = sand.u32 %s39, 1
        %s351 = smul.addr %s350, 32
        %s352 = scalar_lea.vmem [#allocation2], %s351
        %p353 = pneg %p52
        %p354 = pneg %p49
        %p355 = pneg %p73
        %p356 = pneg %p70
        %p357 = pneg %p94
        %p358 = pneg %p91
        %p359 = pneg %p115
        %p360 = pneg %p112
        %p361 = pneg %p136
        %p362 = pneg %p133
        %p363 = pneg %p157
        %p364 = pneg %p154
        %p365 = pneg %p183
        %p366 = pneg %p180
        %s367 = sand.u32 %s170, 1
        %s368 = scalar_lea.sflag [#allocation4], %s367
        %s369 = sand.u32 %s170, 1
        %s370 = smul.addr %s369, 32
        %s371 = scalar_lea.vmem [#allocation10], %s370
        %p372 = pneg %p209
        %p373 = pneg %p206
        %s374 = sand.u32 %s31, 1
        %s375 = scalar_lea.sflag [#allocation12], %s374
        %s376 = sand.u32 %s196, 1
        %s377 = smul.addr %s376, 8
        %s378 = scalar_lea.vmem [#allocation11], %s377
        %p379 = pneg %p235
        %p380 = pneg %p232
        %s381 = sand.u32 %s31, 1
        %s382 = scalar_lea.sflag [#allocation12], %s381
        %s383 = sand.u32 %s222, 1
        %s384 = smul.addr %s383, 8
        %s385 = scalar_lea.vmem [#allocation13], %s384
        %v386 = vld [vmem:[#allocation5] sm:$0xff]
        %v387 = vld [vmem:[#allocation5 + $0x8] sm:$0xff]
        %v388 = vld [vmem:[%s2] sm:$0xff]
        %v389 = vld [vmem:[%s2 + $0x8] sm:$0xff]
        %v390 = vld [vmem:[#allocation7] sm:$0xff]
        %v391 = vld [vmem:[#allocation7 + $0x8] sm:$0xff]
        %v392 = vld [vmem:[#allocation7 + $0x10] sm:$0xff]
        %v393 = vld [vmem:[#allocation7 + $0x18] sm:$0xff]
        %v394 = vld [vmem:[%s4] sm:$0xff]
        %v395 = vld [vmem:[%s4 + $0x8] sm:$0xff]
        %v396 = vld [vmem:[%s4 + $0x10] sm:$0xff]
        %v397 = vld [vmem:[%s4 + $0x18] sm:$0xff]
        %v398 = vld [vmem:[#allocation8] sm:$0xff]
        %v399 = vld [vmem:[#allocation8 + $0x8] sm:$0xff]
        %v400 = vld [vmem:[#allocation8 + $0x10] sm:$0x1]
        %v401 = vld [vmem:[#allocation8 + $0x18] sm:$0x1]
        %v402 = vld [vmem:[%s331] sm:$0xff]
        %v404 = vcombine.high %v402, %v402
        %vm406 = vcmask 1043456
        %v407 = vsel %vm406, %v402, 0.0
        %v408 = vsel %vm406, %v404, 0.0
        %409 = vrot.lane.b32.xlu0 %v407, 17
        %v410 = vpop.permute.xlu0 %409
        %411 = vrot.lane.b32.xlu0 %v408, 17
        %v412 = vpop.permute.xlu0 %411
        %v413 = vlaneseq
        %v414 = vand.u32 %v413, 127
        %vm415 = vcmp.lt.s32.totalorder %v414, 17
        %v416 = vsel %vm415, %v410, %v412
        %v417 = vsel %vm415, %v412, %v410
        %v418 = vlaneseq
        %v419 = vshrl.u32 %v418, 7
        %v420 = vsub.s32 0, %v419
        %v421 = vrot.slane %v398, %v420
        %v422 = vlaneseq
        %v423 = vshrl.u32 %v422, 7
        %v424 = vsub.s32 0, %v423
        %v425 = vrot.slane %v399, %v424
        %v426 = vmul.f32 %v417, %v421
        %v427 = vmul.f32 %v416, %v425
        %428 = vrot.lane.b32.xlu0 %v407, 16
        %v429 = vpop.permute.xlu0 %428
        %430 = vrot.lane.b32.xlu0 %v408, 16
        %v431 = vpop.permute.xlu0 %430
        %vm432 = vcmp.lt.s32.totalorder %v414, 16
        %v433 = vsel %vm432, %v429, %v431
        %v434 = vsel %vm432, %v431, %v429
        %v435 = vlaneseq
        %v436 = vshrl.u32 %v435, 7
        %v437 = vsub.s32 1, %v436
        %v438 = vrot.slane %v398, %v437
        %v439 = vlaneseq
        %v440 = vshrl.u32 %v439, 7
        %v441 = vsub.s32 1, %v440
        %v442 = vrot.slane %v399, %v441
        %v443 = vmul.f32 %v434, %v438
        %v444 = vmul.f32 %v433, %v442
        %445 = vrot.lane.b32.xlu0 %v407, 15
        %v446 = vpop.permute.xlu0 %445
        %447 = vrot.lane.b32.xlu0 %v408, 15
        %v448 = vpop.permute.xlu0 %447
        %vm449 = vcmp.lt.s32.totalorder %v414, 15
        %v450 = vsel %vm449, %v446, %v448
        %v451 = vsel %vm449, %v448, %v446
        %v452 = vlaneseq
        %v453 = vshrl.u32 %v452, 7
        %v454 = vsub.s32 2, %v453
        %v455 = vrot.slane %v398, %v454
        %v456 = vlaneseq
        %v457 = vshrl.u32 %v456, 7
        %v458 = vsub.s32 2, %v457
        %v459 = vrot.slane %v399, %v458
        %v460 = vmul.f32 %v451, %v455
        %v461 = vmul.f32 %v450, %v459
        %462 = vrot.lane.b32.xlu0 %v407, 1
        %v463 = vpop.permute.xlu0 %462
        %464 = vrot.lane.b32.xlu0 %v408, 1
        %v465 = vpop.permute.xlu0 %464
        %vm466 = vcmp.lt.s32.totalorder %v414, 1
        %v467 = vsel %vm466, %v463, %v465
        %v468 = vsel %vm466, %v465, %v463
        %v469 = vlaneseq
        %v470 = vshrl.u32 %v469, 7
        %v471 = vsub.s32 3, %v470
        %v472 = vrot.slane %v398, %v471
        %v473 = vlaneseq
        %v474 = vshrl.u32 %v473, 7
        %v475 = vsub.s32 3, %v474
        %v476 = vrot.slane %v399, %v475
        %v477 = vmul.f32 %v468, %v472
        %v478 = vmul.f32 %v467, %v476
        %v479 = vlaneseq
        %v480 = vshrl.u32 %v479, 7
        %v481 = vsub.s32 4, %v480
        %v482 = vrot.slane %v398, %v481
        %v483 = vlaneseq
        %v484 = vshrl.u32 %v483, 7
        %v485 = vsub.s32 4, %v484
        %v486 = vrot.slane %v399, %v485
        %v487 = vmul.f32 %v407, %v482
        %v488 = vmul.f32 %v408, %v486
        %489 = vrot.lane.b32.xlu0 %v407, 127
        %v490 = vpop.permute.xlu0 %489
        %491 = vrot.lane.b32.xlu0 %v408, 127
        %v492 = vpop.permute.xlu0 %491
        %vm493 = vcmp.lt.s32.totalorder %v414, 127
        %v494 = vsel %vm493, %v490, %v492
        %v495 = vsel %vm493, %v492, %v490
        %v496 = vlaneseq
        %v497 = vshrl.u32 %v496, 7
        %v498 = vsub.s32 5, %v497
        %v499 = vrot.slane %v398, %v498
        %v500 = vlaneseq
        %v501 = vshrl.u32 %v500, 7
        %v502 = vsub.s32 5, %v501
        %v503 = vrot.slane %v399, %v502
        %v504 = vmul.f32 %v494, %v499
        %v505 = vmul.f32 %v495, %v503
        %506 = vrot.lane.b32.xlu0 %v407, 113
        %v507 = vpop.permute.xlu0 %506
        %508 = vrot.lane.b32.xlu0 %v408, 113
        %v509 = vpop.permute.xlu0 %508
        %vm510 = vcmp.lt.s32.totalorder %v414, 113
        %v511 = vsel %vm510, %v507, %v509
        %v512 = vsel %vm510, %v509, %v507
        %v513 = vlaneseq
        %v514 = vshrl.u32 %v513, 7
        %v515 = vsub.s32 6, %v514
        %v516 = vrot.slane %v398, %v515
        %v517 = vlaneseq
        %v518 = vshrl.u32 %v517, 7
        %v519 = vsub.s32 6, %v518
        %v520 = vrot.slane %v399, %v519
        %v521 = vmul.f32 %v511, %v516
        %v522 = vmul.f32 %v512, %v520
        %523 = vrot.lane.b32.xlu0 %v407, 112
        %v524 = vpop.permute.xlu0 %523
        %525 = vrot.lane.b32.xlu0 %v408, 112
        %v526 = vpop.permute.xlu0 %525
        %vm527 = vcmp.lt.s32.totalorder %v414, 112
        %v528 = vsel %vm527, %v524, %v526
        %v529 = vsel %vm527, %v526, %v524
        %v530 = vlaneseq
        %v531 = vshrl.u32 %v530, 7
        %v532 = vsub.s32 7, %v531
        %v533 = vrot.slane %v398, %v532
        %v534 = vlaneseq
        %v535 = vshrl.u32 %v534, 7
        %v536 = vsub.s32 7, %v535
        %v537 = vrot.slane %v399, %v536
        %v538 = vmul.f32 %v528, %v533
        %v539 = vmul.f32 %v529, %v537
        %540 = vrot.lane.b32.xlu0 %v407, 111
        %v541 = vpop.permute.xlu0 %540
        %542 = vrot.lane.b32.xlu0 %v408, 111
        %v543 = vpop.permute.xlu0 %542
        %vm544 = vcmp.lt.s32.totalorder %v414, 111
        %v545 = vsel %vm544, %v541, %v543
        %v546 = vsel %vm544, %v543, %v541
        %v547 = vlaneseq
        %v548 = vshrl.u32 %v547, 7
        %v549 = vsub.s32 0, %v548
        %v550 = vrot.slane %v400, %v549
        %v551 = vlaneseq
        %v552 = vshrl.u32 %v551, 7
        %v553 = vsub.s32 0, %v552
        %v554 = vrot.slane %v401, %v553
        %v555 = vmul.f32 %v545, %v550
        %v556 = vmul.f32 %v546, %v554
        %558 = vset.pattern.permute.xlu0 0
        %559 = vperm.xlu0 %558, %v388
        %v560 = vpop.permute.xlu0 %559
        %563 = vset.pattern.permute.xlu0 0
        %564 = vperm.xlu0 %563, %v389
        %v565 = vpop.permute.xlu0 %564
        %vm567 = vcmask 588800
        %v569 = vsel %vm567, %v386, 0
        %v572 = vsel %vm567, %v387, 0
        %574 = vmatprep.subr.mxu0 %v427
        %575 = vmatpush1.msra.mxu0 %v426
        %576 = vmatprep.subr.mxu0 %v444
        %577 = vmatpush1.msra.mxu0 %v443
        %578 = vmatprep.subr.mxu0 %v461
        %579 = vmatpush1.msra.mxu0 %v460
        %580 = vmatprep.subr.mxu0 %v478
        %581 = vmatpush1.msra.mxu0 %v477
        %582 = vmatprep.subr.mxu0 %v488
        %583 = vmatpush1.msra.mxu0 %v487
        %584 = vmatprep.subr.mxu0 %v505
        %585 = vmatpush1.msra.mxu0 %v504
        %586 = vmatprep.subr.mxu0 %v522
        %587 = vmatpush1.msra.mxu0 %v521
        %588 = vmatprep.subr.mxu0 %v539
        %589 = vmatpush1.msra.mxu0 %v538
        %590 = vmatprep.subr.mxu0 %v556
        %591 = vmatpush1.msra.mxu0 %v555
        %592 = vmatprep.subr.mxu0 0.0
        %593 = vmatpush1.msra.mxu0 0.0
        %594 = vmatprep.subr.mxu0 0.0
        %595 = vmatpush1.msra.mxu0 0.0
        %596 = vmatprep.subr.mxu0 0.0
        %597 = vmatpush1.msra.mxu0 0.0
        %598 = vmatprep.subr.mxu0 0.0
        %599 = vmatpush1.msra.mxu0 0.0
        %600 = vmatprep.subr.mxu0 0.0
        %601 = vmatpush1.msra.mxu0 0.0
        %602 = vmatprep.subr.mxu0 0.0
        %603 = vmatpush1.msra.mxu0 0.0
        %604 = vmatprep.subr.mxu0 0.0
        %605 = vmatpush1.msra.mxu0 0.0
        %606 = vmatprep.subr.mxu0 0.0
        %607 = vmatpush1.msra.mxu0 0.0
        %608 = vmatprep.subr.mxu0 0.0
        %609 = vmatpush1.msra.mxu0 0.0
        %610 = vmatprep.subr.mxu0 0.0
        %611 = vmatpush1.msra.mxu0 0.0
        %612 = vmatprep.subr.mxu0 0.0
        %613 = vmatpush1.msra.mxu0 0.0
        %614 = vmatprep.subr.mxu0 0.0
        %615 = vmatpush1.msra.mxu0 0.0
        %616 = vmatprep.subr.mxu0 0.0
        %617 = vmatpush1.msra.mxu0 0.0
        %618 = vmatprep.subr.mxu0 0.0
        %619 = vmatpush1.msra.mxu0 0.0
        %620 = vmatprep.subr.mxu0 0.0
        %621 = vmatpush1.msra.mxu0 0.0
        %622 = vmatprep.subr.mxu0 0.0
        %623 = vmatpush1.msra.mxu0 0.0
        %624 = vmatprep.subr.mxu0 0.0
        %625 = vmatpush1.msra.mxu0 0.0
        %626 = vmatprep.subr.mxu0 0.0
        %627 = vmatpush1.msra.mxu0 0.0
        %628 = vmatprep.subr.mxu0 0.0
        %629 = vmatpush1.msra.mxu0 0.0
        %630 = vmatprep.subr.mxu0 0.0
        %631 = vmatpush1.msra.mxu0 0.0
        %632 = vmatprep.subr.mxu0 0.0
        %633 = vmatpush1.msra.mxu0 0.0
        %634 = vmatprep.subr.mxu0 0.0
        %635 = vmatpush1.msra.mxu0 0.0
        %636 = vmatprep.subr.mxu0 0.0
        %637 = vmatpush1.msra.mxu0 0.0
        %638 = vmatprep.mubr.f32.mxu0 0.0
        %639 = vmatmul.mubr.f32.gmra.mrb[0].mxu0 %v569
        %v640 = vpop.f32.mrb[0].mxu0
        %v641 = vadd.f32 %v560, %v640
        %v642 = vpop.f32.mrb[0].mxu0
        %v643 = vadd.f32 %v560, %v642
        %644 = vmatprep.mubr.f32.mxu0 0.0
        %645 = vmatmul.mubr.f32.gmra.mrb[0].mxu0 %v572
        %v646 = vpop.f32.mrb[0].mxu0
        %v647 = vadd.f32 %v565, %v646
        %v648 = vpop.f32.mrb[0].mxu0
        %v649 = vadd.f32 %v565, %v648
        %650 = vdwg.mxu0
        %v651 = vadd.f32 %v641, %v643
        %v652 = vadd.f32 %v651, %v647
        %v653 = vadd.f32 %v652, %v649
        %654 = vadd.xlane.f32.xlu0 %v653
        %v655 = vpop.xlane.xlu0 %654
        %v656 = vrot.slane %v655, 4
        %v657 = vadd.f32 %v655, %v656
        %v658 = vrot.slane %v657, 2
        %v659 = vadd.f32 %v657, %v658
        %v660 = vrot.slane %v659, 1
        %v661 = vadd.f32 %v659, %v660
        %s662 = vtos %v661
        %v663 = vrcp.pop 4096.0
        %s664 = vtos %v663
        %s665 = smul.f32 %s662, %s664
        %v666 = vstv %s665
        %v667 = vsub.f32 %v641, %v666
        %v668 = vsub.f32 %v643, %v666
        %v669 = vsub.f32 %v647, %v666
        %v670 = vsub.f32 %v649, %v666
        %v671 = vmul.f32 %v667, %v667
        %v672 = vmul.f32 %v668, %v668
        %v673 = vmul.f32 %v669, %v669
        %v674 = vmul.f32 %v670, %v670
        %v675 = vadd.f32 %v671, %v672
        %v676 = vadd.f32 %v675, %v673
        %v677 = vadd.f32 %v676, %v674
        %678 = vadd.xlane.f32.xlu0 %v677
        %v679 = vpop.xlane.xlu0 %678
        %v680 = vrot.slane %v679, 4
        %v681 = vadd.f32 %v679, %v680
        %v682 = vrot.slane %v681, 2
        %v683 = vadd.f32 %v681, %v682
        %v684 = vrot.slane %v683, 1
        %v685 = vadd.f32 %v683, %v684
        %s686 = vtos %v685
        %v687 = vrcp.pop 4096.0
        %s688 = vtos %v687
        %s689 = smul.f32 %s686, %s688
        %s690 = sadd.f32 %s689, 1e-05
        %v691 = vstv %s690
        %v692 = vrsqrt.pop %v691
        %s693 = vtos %v692
        %v694 = vstv %s693
        %v695 = vmul.f32 %v667, %v694
        %v696 = vmul.f32 %v668, %v694
        %v697 = vmul.f32 %v669, %v694
        %v698 = vmul.f32 %v670, %v694
        %v699 = vmul.f32 %v695, %v390
        %v700 = vmul.f32 %v696, %v391
        %v701 = vmul.f32 %v697, %v392
        %v702 = vmul.f32 %v698, %v393
        %v703 = vadd.f32 %v699, %v394
        %v704 = vadd.f32 %v700, %v395
        %v705 = vadd.f32 %v701, %v396
        %v706 = vadd.f32 %v702, %v397
        %v707 = vxor.u32 %v703, 2147483648
        %v708 = vxor.u32 %v704, 2147483648
        %v709 = vmul.f32 %v707, 1.442695
        %v710 = vpow.pop %v709
        %v711 = vmul.f32 %v708, 1.442695
        %v712 = vpow.pop %v711
        %v713 = vadd.f32 %v710, 1.0
        %v714 = vadd.f32 %v712, 1.0
        %v715 = vrcp.pop %v713
        %v716 = vmul.f32 1.0, %v715
        %v717 = vrcp.pop %v714
        %v718 = vmul.f32 1.0, %v717
        %v719 = vxor.u32 %v705, 2147483648
        %v720 = vxor.u32 %v706, 2147483648
        %v721 = vmul.f32 %v719, 1.442695
        %v722 = vpow.pop %v721
        %v723 = vmul.f32 %v720, 1.442695
        %v724 = vpow.pop %v723
        %v725 = vadd.f32 %v722, 1.0
        %v726 = vadd.f32 %v724, 1.0
        %v727 = vrcp.pop %v725
        %v728 = vmul.f32 1.0, %v727
        %v729 = vrcp.pop %v726
        %v730 = vmul.f32 1.0, %v729
        %v731 = vtanh.pop %v705
        %v732 = vtanh.pop %v706
        %v733 = vmul.f32 %v716, 0.0
        %v734 = vmul.f32 %v718, 0.0
        %v737 = vrot.slane %v731, 4
        %v738 = vrot.slane %v732, 4
        %v741 = vmul.f32 %v716, %v737
        %v742 = vmul.f32 %v718, %v738
        %v745 = vrot.slane %v741, 4
        %v746 = vrot.slane %v742, 4
        %v749 = vadd.f32 %v733, %v745
        %v750 = vadd.f32 %v734, %v746
        %v751 = vtanh.pop %v749
        %v752 = vtanh.pop %v750
        %v755 = vrot.slane %v751, 4
        %v756 = vrot.slane %v752, 4
        %v759 = vmul.f32 %v728, %v755
        %v760 = vmul.f32 %v730, %v756
        %v761 = vadd.f32 %v759, %v402
        %v762 = vadd.f32 %v760, %v404
        %v765 = vcombine.low %v761, %v762
        %767 = vst [vmem:[%s371] sm:$0xff] %v765
        %s768 = scalar_lea.vmem %s331, 8 [#allocation2]
        %v769 = vld [vmem:[%s768] sm:$0xff]
        %v771 = vcombine.high %v769, %v769
        %v773 = vrot.slane %v761, 4
        %v774 = vrot.slane %v762, 4
        %v777 = vsel %vm406, %v769, %v773
        %v778 = vsel %vm406, %v771, %v774
        %779 = vrot.lane.b32.xlu0 %v777, 17
        %v780 = vpop.permute.xlu0 %779
        %781 = vrot.lane.b32.xlu0 %v778, 17
        %v782 = vpop.permute.xlu0 %781
        %v783 = vsel %vm415, %v780, %v782
        %v784 = vsel %vm415, %v782, %v780
        %v785 = vmul.f32 %v784, %v421
        %v786 = vmul.f32 %v783, %v425
        %787 = vrot.lane.b32.xlu0 %v777, 16
        %v788 = vpop.permute.xlu0 %787
        %789 = vrot.lane.b32.xlu0 %v778, 16
        %v790 = vpop.permute.xlu0 %789
        %v791 = vsel %vm432, %v788, %v790
        %v792 = vsel %vm432, %v790, %v788
        %v793 = vmul.f32 %v792, %v438
        %v794 = vmul.f32 %v791, %v442
        %795 = vrot.lane.b32.xlu0 %v777, 15
        %v796 = vpop.permute.xlu0 %795
        %797 = vrot.lane.b32.xlu0 %v778, 15
        %v798 = vpop.permute.xlu0 %797
        %v799 = vsel %vm449, %v796, %v798
        %v800 = vsel %vm449, %v798, %v796
        %v801 = vmul.f32 %v800, %v455
        %v802 = vmul.f32 %v799, %v459
        %803 = vrot.lane.b32.xlu0 %v777, 1
        %v804 = vpop.permute.xlu0 %803
        %805 = vrot.lane.b32.xlu0 %v778, 1
        %v806 = vpop.permute.xlu0 %805
        %v807 = vsel %vm466, %v804, %v806
        %v808 = vsel %vm466, %v806, %v804
        %v809 = vmul.f32 %v808, %v472
        %v810 = vmul.f32 %v807, %v476
        %v811 = vmul.f32 %v777, %v482
        %v812 = vmul.f32 %v778, %v486
        %813 = vrot.lane.b32.xlu0 %v777, 127
        %v814 = vpop.permute.xlu0 %813
        %815 = vrot.lane.b32.xlu0 %v778, 127
        %v816 = vpop.permute.xlu0 %815
        %v817 = vsel %vm493, %v814, %v816
        %v818 = vsel %vm493, %v816, %v814
        %v819 = vmul.f32 %v817, %v499
        %v820 = vmul.f32 %v818, %v503
        %821 = vrot.lane.b32.xlu0 %v777, 113
        %v822 = vpop.permute.xlu0 %821
        %823 = vrot.lane.b32.xlu0 %v778, 113
        %v824 = vpop.permute.xlu0 %823
        %v825 = vsel %vm510, %v822, %v824
        %v826 = vsel %vm510, %v824, %v822
        %v827 = vmul.f32 %v825, %v516
        %v828 = vmul.f32 %v826, %v520
        %829 = vrot.lane.b32.xlu0 %v777, 112
        %v830 = vpop.permute.xlu0 %829
        %831 = vrot.lane.b32.xlu0 %v778, 112
        %v832 = vpop.permute.xlu0 %831
        %v833 = vsel %vm527, %v830, %v832
        %v834 = vsel %vm527, %v832, %v830
        %v835 = vmul.f32 %v833, %v533
        %v836 = vmul.f32 %v834, %v537
        %837 = vrot.lane.b32.xlu0 %v777, 111
        %v838 = vpop.permute.xlu0 %837
        %839 = vrot.lane.b32.xlu0 %v778, 111
        %v840 = vpop.permute.xlu0 %839
        %v841 = vsel %vm544, %v838, %v840
        %v842 = vsel %vm544, %v840, %v838
        %v843 = vmul.f32 %v841, %v550
        %v844 = vmul.f32 %v842, %v554
        %845 = vmatprep.subr.mxu0 %v786
        %846 = vmatpush1.msra.mxu0 %v785
        %847 = vmatprep.subr.mxu0 %v794
        %848 = vmatpush1.msra.mxu0 %v793
        %849 = vmatprep.subr.mxu0 %v802
        %850 = vmatpush1.msra.mxu0 %v801
        %851 = vmatprep.subr.mxu0 %v810
        %852 = vmatpush1.msra.mxu0 %v809
        %853 = vmatprep.subr.mxu0 %v812
        %854 = vmatpush1.msra.mxu0 %v811
        %855 = vmatprep.subr.mxu0 %v820
        %856 = vmatpush1.msra.mxu0 %v819
        %857 = vmatprep.subr.mxu0 %v828
        %858 = vmatpush1.msra.mxu0 %v827
        %859 = vmatprep.subr.mxu0 %v836
        %860 = vmatpush1.msra.mxu0 %v835
        %861 = vmatprep.subr.mxu0 %v844
        %862 = vmatpush1.msra.mxu0 %v843
        %863 = vmatprep.subr.mxu0 0.0
        %864 = vmatpush1.msra.mxu0 0.0
        %865 = vmatprep.subr.mxu0 0.0
        %866 = vmatpush1.msra.mxu0 0.0
        %867 = vmatprep.subr.mxu0 0.0
        %868 = vmatpush1.msra.mxu0 0.0
        %869 = vmatprep.subr.mxu0 0.0
        %870 = vmatpush1.msra.mxu0 0.0
        %871 = vmatprep.subr.mxu0 0.0
        %872 = vmatpush1.msra.mxu0 0.0
        %873 = vmatprep.subr.mxu0 0.0
        %874 = vmatpush1.msra.mxu0 0.0
        %875 = vmatprep.subr.mxu0 0.0
        %876 = vmatpush1.msra.mxu0 0.0
        %877 = vmatprep.subr.mxu0 0.0
        %878 = vmatpush1.msra.mxu0 0.0
        %879 = vmatprep.subr.mxu0 0.0
        %880 = vmatpush1.msra.mxu0 0.0
        %881 = vmatprep.subr.mxu0 0.0
        %882 = vmatpush1.msra.mxu0 0.0
        %883 = vmatprep.subr.mxu0 0.0
        %884 = vmatpush1.msra.mxu0 0.0
        %885 = vmatprep.subr.mxu0 0.0
        %886 = vmatpush1.msra.mxu0 0.0
        %887 = vmatprep.subr.mxu0 0.0
        %888 = vmatpush1.msra.mxu0 0.0
        %889 = vmatprep.subr.mxu0 0.0
        %890 = vmatpush1.msra.mxu0 0.0
        %891 = vmatprep.subr.mxu0 0.0
        %892 = vmatpush1.msra.mxu0 0.0
        %893 = vmatprep.subr.mxu0 0.0
        %894 = vmatpush1.msra.mxu0 0.0
        %895 = vmatprep.subr.mxu0 0.0
        %896 = vmatpush1.msra.mxu0 0.0
        %897 = vmatprep.subr.mxu0 0.0
        %898 = vmatpush1.msra.mxu0 0.0
        %899 = vmatprep.subr.mxu0 0.0
        %900 = vmatpush1.msra.mxu0 0.0
        %901 = vmatprep.subr.mxu0 0.0
        %902 = vmatpush1.msra.mxu0 0.0
        %903 = vmatprep.subr.mxu0 0.0
        %904 = vmatpush1.msra.mxu0 0.0
        %905 = vmatprep.subr.mxu0 0.0
        %906 = vmatpush1.msra.mxu0 0.0
        %907 = vmatprep.subr.mxu0 0.0
        %908 = vmatpush1.msra.mxu0 0.0
        %909 = vmatprep.mubr.f32.mxu0 0.0
        %910 = vmatmul.mubr.f32.gmra.mrb[0].mxu0 %v569
        %v911 = vpop.f32.mrb[0].mxu0
        %v912 = vadd.f32 %v560, %v911
        %v913 = vpop.f32.mrb[0].mxu0
        %v914 = vadd.f32 %v560, %v913
        %915 = vmatprep.mubr.f32.mxu0 0.0
        %916 = vmatmul.mubr.f32.gmra.mrb[0].mxu0 %v572
        %v917 = vpop.f32.mrb[0].mxu0
        %v918 = vadd.f32 %v565, %v917
        %v919 = vpop.f32.mrb[0].mxu0
        %v920 = vadd.f32 %v565, %v919
        %921 = vdwg.mxu0
        %v922 = vadd.f32 %v912, %v914
        %v923 = vadd.f32 %v922, %v918
        %v924 = vadd.f32 %v923, %v920
        %925 = vadd.xlane.f32.xlu0 %v924
        %v926 = vpop.xlane.xlu0 %925
        %v927 = vrot.slane %v926, 4
        %v928 = vadd.f32 %v926, %v927
        %v929 = vrot.slane %v928, 2
        %v930 = vadd.f32 %v928, %v929
        %v931 = vrot.slane %v930, 1
        %v932 = vadd.f32 %v930, %v931
        %s933 = vtos %v932
        %v934 = vrcp.pop 4096.0
        %s935 = vtos %v934
        %s936 = smul.f32 %s933, %s935
        %v937 = vstv %s936
        %v938 = vsub.f32 %v912, %v937
        %v939 = vsub.f32 %v914, %v937
        %v940 = vsub.f32 %v918, %v937
        %v941 = vsub.f32 %v920, %v937
        %v942 = vmul.f32 %v938, %v938
        %v943 = vmul.f32 %v939, %v939
        %v944 = vmul.f32 %v940, %v940
        %v945 = vmul.f32 %v941, %v941
        %v946 = vadd.f32 %v942, %v943
        %v947 = vadd.f32 %v946, %v944
        %v948 = vadd.f32 %v947, %v945
        %949 = vadd.xlane.f32.xlu0 %v948
        %v950 = vpop.xlane.xlu0 %949
        %v951 = vrot.slane %v950, 4
        %v952 = vadd.f32 %v950, %v951
        %v953 = vrot.slane %v952, 2
        %v954 = vadd.f32 %v952, %v953
        %v955 = vrot.slane %v954, 1
        %v956 = vadd.f32 %v954, %v955
        %s957 = vtos %v956
        %v958 = vrcp.pop 4096.0
        %s959 = vtos %v958
        %s960 = smul.f32 %s957, %s959
        %s961 = sadd.f32 %s960, 1e-05
        %v962 = vstv %s961
        %v963 = vrsqrt.pop %v962
        %s964 = vtos %v963
        %v965 = vstv %s964
        %v966 = vmul.f32 %v938, %v965
        %v967 = vmul.f32 %v939, %v965
        %v968 = vmul.f32 %v940, %v965
        %v969 = vmul.f32 %v941, %v965
        %v970 = vmul.f32 %v966, %v390
        %v971 = vmul.f32 %v967, %v391
        %v972 = vmul.f32 %v968, %v392
        %v973 = vmul.f32 %v969, %v393
        %v974 = vadd.f32 %v970, %v394
        %v975 = vadd.f32 %v971, %v395
        %v976 = vadd.f32 %v972, %v396
        %v977 = vadd.f32 %v973, %v397
        %v978 = vxor.u32 %v974, 2147483648
        %v979 = vxor.u32 %v975, 2147483648
        %v980 = vmul.f32 %v978, 1.442695
        %v981 = vpow.pop %v980
        %v982 = vmul.f32 %v979, 1.442695
        %v983 = vpow.pop %v982
        %v984 = vadd.f32 %v981, 1.0
        %v985 = vadd.f32 %v983, 1.0
        %v986 = vrcp.pop %v984
        %v987 = vmul.f32 1.0, %v986
        %v988 = vrcp.pop %v985
        %v989 = vmul.f32 1.0, %v988
        %v990 = vxor.u32 %v976, 2147483648
        %v991 = vxor.u32 %v977, 2147483648
        %v992 = vmul.f32 %v990, 1.442695
        %v993 = vpow.pop %v992
        %v994 = vmul.f32 %v991, 1.442695
        %v995 = vpow.pop %v994
        %v996 = vadd.f32 %v993, 1.0
        %v997 = vadd.f32 %v995, 1.0
        %v998 = vrcp.pop %v996
        %v999 = vmul.f32 1.0, %v998
        %v1000 = vrcp.pop %v997
        %v1001 = vmul.f32 1.0, %v1000
        %v1002 = vtanh.pop %v976
        %v1003 = vtanh.pop %v977
        %v1004 = vmul.f32 %v987, %v749
        %v1005 = vmul.f32 %v989, %v750
        %v1008 = vrot.slane %v1002, 4
        %v1009 = vrot.slane %v1003, 4
        %v1012 = vmul.f32 %v987, %v1008
        %v1013 = vmul.f32 %v989, %v1009
        %v1016 = vrot.slane %v1012, 4
        %v1017 = vrot.slane %v1013, 4
        %v1020 = vadd.f32 %v1004, %v1016
        %v1021 = vadd.f32 %v1005, %v1017
        %v1022 = vtanh.pop %v1020
        %v1023 = vtanh.pop %v1021
        %v1026 = vrot.slane %v1022, 4
        %v1027 = vrot.slane %v1023, 4
        %v1030 = vmul.f32 %v999, %v1026
        %v1031 = vmul.f32 %v1001, %v1027
        %v1032 = vadd.f32 %v1030, %v769
        %v1033 = vadd.f32 %v1031, %v771
        %v1036 = vcombine.low %v1032, %v1033
        %s1038 = scalar_lea.vmem %s371, 8 [#allocation10]
        %1039 = vst [vmem:[%s1038] sm:$0xff] %v1036
        %s1040 = scalar_lea.vmem %s331, 16 [#allocation2]
        %v1041 = vld [vmem:[%s1040] sm:$0xff]
        %v1043 = vcombine.high %v1041, %v1041
        %v1045 = vrot.slane %v1032, 4
        %v1046 = vrot.slane %v1033, 4
        %v1049 = vsel %vm406, %v1041, %v1045
        %v1050 = vsel %vm406, %v1043, %v1046
        %1051 = vrot.lane.b32.xlu0 %v1049, 17
        %v1052 = vpop.permute.xlu0 %1051
        %1053 = vrot.lane.b32.xlu0 %v1050, 17
        %v1054 = vpop.permute.xlu0 %1053
        %v1055 = vsel %vm415, %v1052, %v1054
        %v1056 = vsel %vm415, %v1054, %v1052
        %v1057 = vmul.f32 %v1056, %v421
        %v1058 = vmul.f32 %v1055, %v425
        %1059 = vrot.lane.b32.xlu0 %v1049, 16
        %v1060 = vpop.permute.xlu0 %1059
        %1061 = vrot.lane.b32.xlu0 %v1050, 16
        %v1062 = vpop.permute.xlu0 %1061
        %v1063 = vsel %vm432, %v1060, %v1062
        %v1064 = vsel %vm432, %v1062, %v1060
        %v1065 = vmul.f32 %v1064, %v438
        %v1066 = vmul.f32 %v1063, %v442
        %1067 = vrot.lane.b32.xlu0 %v1049, 15
        %v1068 = vpop.permute.xlu0 %1067
        %1069 = vrot.lane.b32.xlu0 %v1050, 15
        %v1070 = vpop.permute.xlu0 %1069
        %v1071 = vsel %vm449, %v1068, %v1070
        %v1072 = vsel %vm449, %v1070, %v1068
        %v1073 = vmul.f32 %v1072, %v455
        %v1074 = vmul.f32 %v1071, %v459
        %1075 = vrot.lane.b32.xlu0 %v1049, 1
        %v1076 = vpop.permute.xlu0 %1075
        %1077 = vrot.lane.b32.xlu0 %v1050, 1
        %v1078 = vpop.permute.xlu0 %1077
        %v1079 = vsel %vm466, %v1076, %v1078
        %v1080 = vsel %vm466, %v1078, %v1076
        %v1081 = vmul.f32 %v1080, %v472
        %v1082 = vmul.f32 %v1079, %v476
        %v1083 = vmul.f32 %v1049, %v482
        %v1084 = vmul.f32 %v1050, %v486
        %1085 = vrot.lane.b32.xlu0 %v1049, 127
        %v1086 = vpop.permute.xlu0 %1085
        %1087 = vrot.lane.b32.xlu0 %v1050, 127
        %v1088 = vpop.permute.xlu0 %1087
        %v1089 = vsel %vm493, %v1086, %v1088
        %v1090 = vsel %vm493, %v1088, %v1086
        %v1091 = vmul.f32 %v1089, %v499
        %v1092 = vmul.f32 %v1090, %v503
        %1093 = vrot.lane.b32.xlu0 %v1049, 113
        %v1094 = vpop.permute.xlu0 %1093
        %1095 = vrot.lane.b32.xlu0 %v1050, 113
        %v1096 = vpop.permute.xlu0 %1095
        %v1097 = vsel %vm510, %v1094, %v1096
        %v1098 = vsel %vm510, %v1096, %v1094
        %v1099 = vmul.f32 %v1097, %v516
        %v1100 = vmul.f32 %v1098, %v520
        %1101 = vrot.lane.b32.xlu0 %v1049, 112
        %v1102 = vpop.permute.xlu0 %1101
        %1103 = vrot.lane.b32.xlu0 %v1050, 112
        %v1104 = vpop.permute.xlu0 %1103
        %v1105 = vsel %vm527, %v1102, %v1104
        %v1106 = vsel %vm527, %v1104, %v1102
        %v1107 = vmul.f32 %v1105, %v533
        %v1108 = vmul.f32 %v1106, %v537
        %1109 = vrot.lane.b32.xlu0 %v1049, 111
        %v1110 = vpop.permute.xlu0 %1109
        %1111 = vrot.lane.b32.xlu0 %v1050, 111
        %v1112 = vpop.permute.xlu0 %1111
        %v1113 = vsel %vm544, %v1110, %v1112
        %v1114 = vsel %vm544, %v1112, %v1110
        %v1115 = vmul.f32 %v1113, %v550
        %v1116 = vmul.f32 %v1114, %v554
        %1117 = vmatprep.subr.mxu0 %v1058
        %1118 = vmatpush1.msra.mxu0 %v1057
        %1119 = vmatprep.subr.mxu0 %v1066
        %1120 = vmatpush1.msra.mxu0 %v1065
        %1121 = vmatprep.subr.mxu0 %v1074
        %1122 = vmatpush1.msra.mxu0 %v1073
        %1123 = vmatprep.subr.mxu0 %v1082
        %1124 = vmatpush1.msra.mxu0 %v1081
        %1125 = vmatprep.subr.mxu0 %v1084
        %1126 = vmatpush1.msra.mxu0 %v1083
        %1127 = vmatprep.subr.mxu0 %v1092
        %1128 = vmatpush1.msra.mxu0 %v1091
        %1129 = vmatprep.subr.mxu0 %v1100
        %1130 = vmatpush1.msra.mxu0 %v1099
        %1131 = vmatprep.subr.mxu0 %v1108
        %1132 = vmatpush1.msra.mxu0 %v1107
        %1133 = vmatprep.subr.mxu0 %v1116
        %1134 = vmatpush1.msra.mxu0 %v1115
        %1135 = vmatprep.subr.mxu0 0.0
        %1136 = vmatpush1.msra.mxu0 0.0
        %1137 = vmatprep.subr.mxu0 0.0
        %1138 = vmatpush1.msra.mxu0 0.0
        %1139 = vmatprep.subr.mxu0 0.0
        %1140 = vmatpush1.msra.mxu0 0.0
        %1141 = vmatprep.subr.mxu0 0.0
        %1142 = vmatpush1.msra.mxu0 0.0
        %1143 = vmatprep.subr.mxu0 0.0
        %1144 = vmatpush1.msra.mxu0 0.0
        %1145 = vmatprep.subr.mxu0 0.0
        %1146 = vmatpush1.msra.mxu0 0.0
        %1147 = vmatprep.subr.mxu0 0.0
        %1148 = vmatpush1.msra.mxu0 0.0
        %1149 = vmatprep.subr.mxu0 0.0
        %1150 = vmatpush1.msra.mxu0 0.0
        %1151 = vmatprep.subr.mxu0 0.0
        %1152 = vmatpush1.msra.mxu0 0.0
        %1153 = vmatprep.subr.mxu0 0.0
        %1154 = vmatpush1.msra.mxu0 0.0
        %1155 = vmatprep.subr.mxu0 0.0
        %1156 = vmatpush1.msra.mxu0 0.0
        %1157 = vmatprep.subr.mxu0 0.0
        %1158 = vmatpush1.msra.mxu0 0.0
        %1159 = vmatprep.subr.mxu0 0.0
        %1160 = vmatpush1.msra.mxu0 0.0
        %1161 = vmatprep.subr.mxu0 0.0
        %1162 = vmatpush1.msra.mxu0 0.0
        %1163 = vmatprep.subr.mxu0 0.0
        %1164 = vmatpush1.msra.mxu0 0.0
        %1165 = vmatprep.subr.mxu0 0.0
        %1166 = vmatpush1.msra.mxu0 0.0
        %1167 = vmatprep.subr.mxu0 0.0
        %1168 = vmatpush1.msra.mxu0 0.0
        %1169 = vmatprep.subr.mxu0 0.0
        %1170 = vmatpush1.msra.mxu0 0.0
        %1171 = vmatprep.subr.mxu0 0.0
        %1172 = vmatpush1.msra.mxu0 0.0
        %1173 = vmatprep.subr.mxu0 0.0
        %1174 = vmatpush1.msra.mxu0 0.0
        %1175 = vmatprep.subr.mxu0 0.0
        %1176 = vmatpush1.msra.mxu0 0.0
        %1177 = vmatprep.subr.mxu0 0.0
        %1178 = vmatpush1.msra.mxu0 0.0
        %1179 = vmatprep.subr.mxu0 0.0
        %1180 = vmatpush1.msra.mxu0 0.0
        %1181 = vmatprep.mubr.f32.mxu0 0.0
        %1182 = vmatmul.mubr.f32.gmra.mrb[0].mxu0 %v569
        %v1183 = vpop.f32.mrb[0].mxu0
        %v1184 = vadd.f32 %v560, %v1183
        %v1185 = vpop.f32.mrb[0].mxu0
        %v1186 = vadd.f32 %v560, %v1185
        %1187 = vmatprep.mubr.f32.mxu0 0.0
        %1188 = vmatmul.mubr.f32.gmra.mrb[0].mxu0 %v572
        %v1189 = vpop.f32.mrb[0].mxu0
        %v1190 = vadd.f32 %v565, %v1189
        %v1191 = vpop.f32.mrb[0].mxu0
        %v1192 = vadd.f32 %v565, %v1191
        %1193 = vdwg.mxu0
        %v1194 = vadd.f32 %v1184, %v1186
        %v1195 = vadd.f32 %v1194, %v1190
        %v1196 = vadd.f32 %v1195, %v1192
        %1197 = vadd.xlane.f32.xlu0 %v1196
        %v1198 = vpop.xlane.xlu0 %1197
        %v1199 = vrot.slane %v1198, 4
        %v1200 = vadd.f32 %v1198, %v1199
        %v1201 = vrot.slane %v1200, 2
        %v1202 = vadd.f32 %v1200, %v1201
        %v1203 = vrot.slane %v1202, 1
        %v1204 = vadd.f32 %v1202, %v1203
        %s1205 = vtos %v1204
        %v1206 = vrcp.pop 4096.0
        %s1207 = vtos %v1206
        %s1208 = smul.f32 %s1205, %s1207
        %v1209 = vstv %s1208
        %v1210 = vsub.f32 %v1184, %v1209
        %v1211 = vsub.f32 %v1186, %v1209
        %v1212 = vsub.f32 %v1190, %v1209
        %v1213 = vsub.f32 %v1192, %v1209
        %v1214 = vmul.f32 %v1210, %v1210
        %v1215 = vmul.f32 %v1211, %v1211
        %v1216 = vmul.f32 %v1212, %v1212
        %v1217 = vmul.f32 %v1213, %v1213
        %v1218 = vadd.f32 %v1214, %v1215
        %v1219 = vadd.f32 %v1218, %v1216
        %v1220 = vadd.f32 %v1219, %v1217
        %1221 = vadd.xlane.f32.xlu0 %v1220
        %v1222 = vpop.xlane.xlu0 %1221
        %v1223 = vrot.slane %v1222, 4
        %v1224 = vadd.f32 %v1222, %v1223
        %v1225 = vrot.slane %v1224, 2
        %v1226 = vadd.f32 %v1224, %v1225
        %v1227 = vrot.slane %v1226, 1
        %v1228 = vadd.f32 %v1226, %v1227
        %s1229 = vtos %v1228
        %v1230 = vrcp.pop 4096.0
        %s1231 = vtos %v1230
        %s1232 = smul.f32 %s1229, %s1231
        %s1233 = sadd.f32 %s1232, 1e-05
        %v1234 = vstv %s1233
        %v1235 = vrsqrt.pop %v1234
        %s1236 = vtos %v1235
        %v1237 = vstv %s1236
        %v1238 = vmul.f32 %v1210, %v1237
        %v1239 = vmul.f32 %v1211, %v1237
        %v1240 = vmul.f32 %v1212, %v1237
        %v1241 = vmul.f32 %v1213, %v1237
        %v1242 = vmul.f32 %v1238, %v390
        %v1243 = vmul.f32 %v1239, %v391
        %v1244 = vmul.f32 %v1240, %v392
        %v1245 = vmul.f32 %v1241, %v393
        %v1246 = vadd.f32 %v1242, %v394
        %v1247 = vadd.f32 %v1243, %v395
        %v1248 = vadd.f32 %v1244, %v396
        %v1249 = vadd.f32 %v1245, %v397
        %v1250 = vxor.u32 %v1246, 2147483648
        %v1251 = vxor.u32 %v1247, 2147483648
        %v1252 = vmul.f32 %v1250, 1.442695
        %v1253 = vpow.pop %v1252
        %v1254 = vmul.f32 %v1251, 1.442695
        %v1255 = vpow.pop %v1254
        %v1256 = vadd.f32 %v1253, 1.0
        %v1257 = vadd.f32 %v1255, 1.0
        %v1258 = vrcp.pop %v1256
        %v1259 = vmul.f32 1.0, %v1258
        %v1260 = vrcp.pop %v1257
        %v1261 = vmul.f32 1.0, %v1260
        %v1262 = vxor.u32 %v1248, 2147483648
        %v1263 = vxor.u32 %v1249, 2147483648
        %v1264 = vmul.f32 %v1262, 1.442695
        %v1265 = vpow.pop %v1264
        %v1266 = vmul.f32 %v1263, 1.442695
        %v1267 = vpow.pop %v1266
        %v1268 = vadd.f32 %v1265, 1.0
        %v1269 = vadd.f32 %v1267, 1.0
        %v1270 = vrcp.pop %v1268
        %v1271 = vmul.f32 1.0, %v1270
        %v1272 = vrcp.pop %v1269
        %v1273 = vmul.f32 1.0, %v1272
        %v1274 = vtanh.pop %v1248
        %v1275 = vtanh.pop %v1249
        %v1276 = vmul.f32 %v1259, %v1020
        %v1277 = vmul.f32 %v1261, %v1021
        %v1280 = vrot.slane %v1274, 4
        %v1281 = vrot.slane %v1275, 4
        %v1284 = vmul.f32 %v1259, %v1280
        %v1285 = vmul.f32 %v1261, %v1281
        %v1288 = vrot.slane %v1284, 4
        %v1289 = vrot.slane %v1285, 4
        %v1292 = vadd.f32 %v1276, %v1288
        %v1293 = vadd.f32 %v1277, %v1289
        %v1294 = vtanh.pop %v1292
        %v1295 = vtanh.pop %v1293
        %v1298 = vrot.slane %v1294, 4
        %v1299 = vrot.slane %v1295, 4
        %v1302 = vmul.f32 %v1271, %v1298
        %v1303 = vmul.f32 %v1273, %v1299
        %v1304 = vadd.f32 %v1302, %v1041
        %v1305 = vadd.f32 %v1303, %v1043
        %v1308 = vcombine.low %v1304, %v1305
        %s1310 = scalar_lea.vmem %s371, 16 [#allocation10]
        %1311 = vst [vmem:[%s1310] sm:$0xff] %v1308
        %s1312 = scalar_lea.vmem %s331, 24 [#allocation2]
        %v1313 = vld [vmem:[%s1312] sm:$0xff]
        %v1315 = vcombine.high %v1313, %v1313
        %v1317 = vrot.slane %v1304, 4
        %v1318 = vrot.slane %v1305, 4
        %v1321 = vsel %vm406, %v1313, %v1317
        %v1322 = vsel %vm406, %v1315, %v1318
        %1323 = vrot.lane.b32.xlu0 %v1321, 17
        %v1324 = vpop.permute.xlu0 %1323
        %1325 = vrot.lane.b32.xlu0 %v1322, 17
        %v1326 = vpop.permute.xlu0 %1325
        %v1327 = vsel %vm415, %v1324, %v1326
        %v1328 = vsel %vm415, %v1326, %v1324
        %v1329 = vmul.f32 %v1328, %v421
        %v1330 = vmul.f32 %v1327, %v425
        %1331 = vrot.lane.b32.xlu0 %v1321, 16
        %v1332 = vpop.permute.xlu0 %1331
        %1333 = vrot.lane.b32.xlu0 %v1322, 16
        %v1334 = vpop.permute.xlu0 %1333
        %v1335 = vsel %vm432, %v1332, %v1334
        %v1336 = vsel %vm432, %v1334, %v1332
        %v1337 = vmul.f32 %v1336, %v438
        %v1338 = vmul.f32 %v1335, %v442
        %1339 = vrot.lane.b32.xlu0 %v1321, 15
        %v1340 = vpop.permute.xlu0 %1339
        %1341 = vrot.lane.b32.xlu0 %v1322, 15
        %v1342 = vpop.permute.xlu0 %1341
        %v1343 = vsel %vm449, %v1340, %v1342
        %v1344 = vsel %vm449, %v1342, %v1340
        %v1345 = vmul.f32 %v1344, %v455
        %v1346 = vmul.f32 %v1343, %v459
        %1347 = vrot.lane.b32.xlu0 %v1321, 1
        %v1348 = vpop.permute.xlu0 %1347
        %1349 = vrot.lane.b32.xlu0 %v1322, 1
        %v1350 = vpop.permute.xlu0 %1349
        %v1351 = vsel %vm466, %v1348, %v1350
        %v1352 = vsel %vm466, %v1350, %v1348
        %v1353 = vmul.f32 %v1352, %v472
        %v1354 = vmul.f32 %v1351, %v476
        %v1355 = vmul.f32 %v1321, %v482
        %v1356 = vmul.f32 %v1322, %v486
        %1357 = vrot.lane.b32.xlu0 %v1321, 127
        %v1358 = vpop.permute.xlu0 %1357
        %1359 = vrot.lane.b32.xlu0 %v1322, 127
        %v1360 = vpop.permute.xlu0 %1359
        %v1361 = vsel %vm493, %v1358, %v1360
        %v1362 = vsel %vm493, %v1360, %v1358
        %v1363 = vmul.f32 %v1361, %v499
        %v1364 = vmul.f32 %v1362, %v503
        %1365 = vrot.lane.b32.xlu0 %v1321, 113
        %v1366 = vpop.permute.xlu0 %1365
        %1367 = vrot.lane.b32.xlu0 %v1322, 113
        %v1368 = vpop.permute.xlu0 %1367
        %v1369 = vsel %vm510, %v1366, %v1368
        %v1370 = vsel %vm510, %v1368, %v1366
        %v1371 = vmul.f32 %v1369, %v516
        %v1372 = vmul.f32 %v1370, %v520
        %1373 = vrot.lane.b32.xlu0 %v1321, 112
        %v1374 = vpop.permute.xlu0 %1373
        %1375 = vrot.lane.b32.xlu0 %v1322, 112
        %v1376 = vpop.permute.xlu0 %1375
        %v1377 = vsel %vm527, %v1374, %v1376
        %v1378 = vsel %vm527, %v1376, %v1374
        %v1379 = vmul.f32 %v1377, %v533
        %v1380 = vmul.f32 %v1378, %v537
        %1381 = vrot.lane.b32.xlu0 %v1321, 111
        %v1382 = vpop.permute.xlu0 %1381
        %1383 = vrot.lane.b32.xlu0 %v1322, 111
        %v1384 = vpop.permute.xlu0 %1383
        %v1385 = vsel %vm544, %v1382, %v1384
        %v1386 = vsel %vm544, %v1384, %v1382
        %v1387 = vmul.f32 %v1385, %v550
        %v1388 = vmul.f32 %v1386, %v554
        %1389 = vmatprep.subr.mxu0 %v1330
        %1390 = vmatpush1.msra.mxu0 %v1329
        %1391 = vmatprep.subr.mxu0 %v1338
        %1392 = vmatpush1.msra.mxu0 %v1337
        %1393 = vmatprep.subr.mxu0 %v1346
        %1394 = vmatpush1.msra.mxu0 %v1345
        %1395 = vmatprep.subr.mxu0 %v1354
        %1396 = vmatpush1.msra.mxu0 %v1353
        %1397 = vmatprep.subr.mxu0 %v1356
        %1398 = vmatpush1.msra.mxu0 %v1355
        %1399 = vmatprep.subr.mxu0 %v1364
        %1400 = vmatpush1.msra.mxu0 %v1363
        %1401 = vmatprep.subr.mxu0 %v1372
        %1402 = vmatpush1.msra.mxu0 %v1371
        %1403 = vmatprep.subr.mxu0 %v1380
        %1404 = vmatpush1.msra.mxu0 %v1379
        %1405 = vmatprep.subr.mxu0 %v1388
        %1406 = vmatpush1.msra.mxu0 %v1387
        %1407 = vmatprep.subr.mxu0 0.0
        %1408 = vmatpush1.msra.mxu0 0.0
        %1409 = vmatprep.subr.mxu0 0.0
        %1410 = vmatpush1.msra.mxu0 0.0
        %1411 = vmatprep.subr.mxu0 0.0
        %1412 = vmatpush1.msra.mxu0 0.0
        %1413 = vmatprep.subr.mxu0 0.0
        %1414 = vmatpush1.msra.mxu0 0.0
        %1415 = vmatprep.subr.mxu0 0.0
        %1416 = vmatpush1.msra.mxu0 0.0
        %1417 = vmatprep.subr.mxu0 0.0
        %1418 = vmatpush1.msra.mxu0 0.0
        %1419 = vmatprep.subr.mxu0 0.0
        %1420 = vmatpush1.msra.mxu0 0.0
        %1421 = vmatprep.subr.mxu0 0.0
        %1422 = vmatpush1.msra.mxu0 0.0
        %1423 = vmatprep.subr.mxu0 0.0
        %1424 = vmatpush1.msra.mxu0 0.0
        %1425 = vmatprep.subr.mxu0 0.0
        %1426 = vmatpush1.msra.mxu0 0.0
        %1427 = vmatprep.subr.mxu0 0.0
        %1428 = vmatpush1.msra.mxu0 0.0
        %1429 = vmatprep.subr.mxu0 0.0
        %1430 = vmatpush1.msra.mxu0 0.0
        %1431 = vmatprep.subr.mxu0 0.0
        %1432 = vmatpush1.msra.mxu0 0.0
        %1433 = vmatprep.subr.mxu0 0.0
        %1434 = vmatpush1.msra.mxu0 0.0
        %1435 = vmatprep.subr.mxu0 0.0
        %1436 = vmatpush1.msra.mxu0 0.0
        %1437 = vmatprep.subr.mxu0 0.0
        %1438 = vmatpush1.msra.mxu0 0.0
        %1439 = vmatprep.subr.mxu0 0.0
        %1440 = vmatpush1.msra.mxu0 0.0
        %1441 = vmatprep.subr.mxu0 0.0
        %1442 = vmatpush1.msra.mxu0 0.0
        %1443 = vmatprep.subr.mxu0 0.0
        %1444 = vmatpush1.msra.mxu0 0.0
        %1445 = vmatprep.subr.mxu0 0.0
        %1446 = vmatpush1.msra.mxu0 0.0
        %1447 = vmatprep.subr.mxu0 0.0
        %1448 = vmatpush1.msra.mxu0 0.0
        %1449 = vmatprep.subr.mxu0 0.0
        %1450 = vmatpush1.msra.mxu0 0.0
        %1451 = vmatprep.subr.mxu0 0.0
        %1452 = vmatpush1.msra.mxu0 0.0
        %1453 = vmatprep.mubr.f32.mxu0 0.0
        %1454 = vmatmul.mubr.f32.gmra.mrb[0].mxu0 %v569
        %v1455 = vpop.f32.mrb[0].mxu0
        %v1456 = vadd.f32 %v560, %v1455
        %v1457 = vpop.f32.mrb[0].mxu0
        %v1458 = vadd.f32 %v560, %v1457
        %1459 = vmatprep.mubr.f32.mxu0 0.0
        %1460 = vmatmul.mubr.f32.gmra.mrb[0].mxu0 %v572
        %v1461 = vpop.f32.mrb[0].mxu0
        %v1462 = vadd.f32 %v565, %v1461
        %v1463 = vpop.f32.mrb[0].mxu0
        %v1464 = vadd.f32 %v565, %v1463
        %1465 = vdwg.mxu0
        %v1466 = vadd.f32 %v1456, %v1458
        %v1467 = vadd.f32 %v1466, %v1462
        %v1468 = vadd.f32 %v1467, %v1464
        %1469 = vadd.xlane.f32.xlu0 %v1468
        %v1470 = vpop.xlane.xlu0 %1469
        %v1471 = vrot.slane %v1470, 4
        %v1472 = vadd.f32 %v1470, %v1471
        %v1473 = vrot.slane %v1472, 2
        %v1474 = vadd.f32 %v1472, %v1473
        %v1475 = vrot.slane %v1474, 1
        %v1476 = vadd.f32 %v1474, %v1475
        %s1477 = vtos %v1476
        %v1478 = vrcp.pop 4096.0
        %s1479 = vtos %v1478
        %s1480 = smul.f32 %s1477, %s1479
        %v1481 = vstv %s1480
        %v1482 = vsub.f32 %v1456, %v1481
        %v1483 = vsub.f32 %v1458, %v1481
        %v1484 = vsub.f32 %v1462, %v1481
        %v1485 = vsub.f32 %v1464, %v1481
        %v1486 = vmul.f32 %v1482, %v1482
        %v1487 = vmul.f32 %v1483, %v1483
        %v1488 = vmul.f32 %v1484, %v1484
        %v1489 = vmul.f32 %v1485, %v1485
        %v1490 = vadd.f32 %v1486, %v1487
        %v1491 = vadd.f32 %v1490, %v1488
        %v1492 = vadd.f32 %v1491, %v1489
        %1493 = vadd.xlane.f32.xlu0 %v1492
        %v1494 = vpop.xlane.xlu0 %1493
        %v1495 = vrot.slane %v1494, 4
        %v1496 = vadd.f32 %v1494, %v1495
        %v1497 = vrot.slane %v1496, 2
        %v1498 = vadd.f32 %v1496, %v1497
        %v1499 = vrot.slane %v1498, 1
        %v1500 = vadd.f32 %v1498, %v1499
        %s1501 = vtos %v1500
        %v1502 = vrcp.pop 4096.0
        %s1503 = vtos %v1502
        %s1504 = smul.f32 %s1501, %s1503
        %s1505 = sadd.f32 %s1504, 1e-05
        %v1506 = vstv %s1505
        %v1507 = vrsqrt.pop %v1506
        %s1508 = vtos %v1507
        %v1509 = vstv %s1508
        %v1510 = vmul.f32 %v1482, %v1509
        %v1511 = vmul.f32 %v1483, %v1509
        %v1512 = vmul.f32 %v1484, %v1509
        %v1513 = vmul.f32 %v1485, %v1509
        %v1514 = vmul.f32 %v1510, %v390
        %v1515 = vmul.f32 %v1511, %v391
        %v1516 = vmul.f32 %v1512, %v392
        %v1517 = vmul.f32 %v1513, %v393
        %v1518 = vadd.f32 %v1514, %v394
        %v1519 = vadd.f32 %v1515, %v395
        %v1520 = vadd.f32 %v1516, %v396
        %v1521 = vadd.f32 %v1517, %v397
        %v1522 = vxor.u32 %v1518, 2147483648
        %v1523 = vxor.u32 %v1519, 2147483648
        %v1524 = vmul.f32 %v1522, 1.442695
        %v1525 = vpow.pop %v1524
        %v1526 = vmul.f32 %v1523, 1.442695
        %v1527 = vpow.pop %v1526
        %v1528 = vadd.f32 %v1525, 1.0
        %v1529 = vadd.f32 %v1527, 1.0
        %v1530 = vrcp.pop %v1528
        %v1531 = vmul.f32 1.0, %v1530
        %v1532 = vrcp.pop %v1529
        %v1533 = vmul.f32 1.0, %v1532
        %v1534 = vxor.u32 %v1520, 2147483648
        %v1535 = vxor.u32 %v1521, 2147483648
        %v1536 = vmul.f32 %v1534, 1.442695
        %v1537 = vpow.pop %v1536
        %v1538 = vmul.f32 %v1535, 1.442695
        %v1539 = vpow.pop %v1538
        %v1540 = vadd.f32 %v1537, 1.0
        %v1541 = vadd.f32 %v1539, 1.0
        %v1542 = vrcp.pop %v1540
        %v1543 = vmul.f32 1.0, %v1542
        %v1544 = vrcp.pop %v1541
        %v1545 = vmul.f32 1.0, %v1544
        %v1546 = vtanh.pop %v1520
        %v1547 = vtanh.pop %v1521
        %v1548 = vmul.f32 %v1531, %v1292
        %v1549 = vmul.f32 %v1533, %v1293
        %v1552 = vrot.slane %v1546, 4
        %v1553 = vrot.slane %v1547, 4
        %v1556 = vmul.f32 %v1531, %v1552
        %v1557 = vmul.f32 %v1533, %v1553
        %v1560 = vrot.slane %v1556, 4
        %v1561 = vrot.slane %v1557, 4
        %v1564 = vadd.f32 %v1548, %v1560
        %v1565 = vadd.f32 %v1549, %v1561
        %v1566 = vtanh.pop %v1564
        %v1567 = vtanh.pop %v1565
        %v1570 = vrot.slane %v1566, 4
        %v1571 = vrot.slane %v1567, 4
        %v1574 = vmul.f32 %v1543, %v1570
        %v1575 = vmul.f32 %v1545, %v1571
        %v1576 = vadd.f32 %v1574, %v1313
        %v1577 = vadd.f32 %v1575, %v1315
        %v1580 = vcombine.low %v1576, %v1577
        %s1582 = scalar_lea.vmem %s371, 24 [#allocation10]
        %1583 = vst [vmem:[%s1582] sm:$0xff] %v1580
        %1584 = vst [vmem:[%s378] sm:$0xff] %v1580
        %v1587 = vcombine.high %v1564, %v1565
        %1589 = vst [vmem:[%s385] sm:$0xff] %v1587
        %s1590 = sand.u32 %s170, 1
        %s1591 = scalar_lea.sflag [#allocation4], %s1590
        %s1592 = sand.u32 %s170, 1
        %s1593 = smul.addr %s1592, 32
        %s1594 = scalar_lea.vmem [#allocation10], %s1593
        %s1595 = sand.u32 %s31, 1
        %s1596 = scalar_lea.sflag [#allocation12], %s1595
        %s1597 = sand.u32 %s196, 1
        %s1598 = smul.addr %s1597, 8
        %s1599 = scalar_lea.vmem [#allocation11], %s1598
        %s1600 = sand.u32 %s31, 1
        %s1601 = scalar_lea.sflag [#allocation12], %s1600
        %s1602 = sand.u32 %s222, 1
        %s1603 = smul.addr %s1602, 8
        %s1604 = scalar_lea.vmem [#allocation13], %s1603
        // Predicated region
        $region61: #{tpu_custom_call.1} parent=43 // pred_check
          %p1605 = pneg %p180
        $region62: #{tpu_custom_call.1} parent=43 // pred_check_branch
          %1607 = sbr.rel (%p1605) target = $region64
        $region63: #{tpu_custom_call.1} parent=43 // pred_region
          %s1609 = ssub.s32 512, 512
          %1610 = vsyncadd %s1591, %s1609
          %s1611 = smul.addr %s31, 8
          %s1612 = smul.addr %s1611, 64
          %s1613 = scalar_lea.hbm %s6, %s1612
          %s1614 = sshll.u32 %s1594, 4
          %s1615 = int_to_ptr.vmem [resolvable:$true] %s1614
          %1620 = dma.vmem_to_hbm [thread:$0]  %s1615, 512, %s1613, %s1591, 128, 128, 8
        $region64: #{tpu_custom_call.1} parent=43 // pred_fallthru
          _
        // Predicated region
        $region65: #{tpu_custom_call.1} parent=43 // pred_check
          %p1621 = pneg %p206
        $region66: #{tpu_custom_call.1} parent=43 // pred_check_branch
          %1623 = sbr.rel (%p1621) target = $region68
        $region67: #{tpu_custom_call.1} parent=43 // pred_region
          %s1625 = ssub.s32 128, 128
          %1626 = vsyncadd %s1596, %s1625
          %s1627 = smul.addr %s31, 2
          %s1628 = smul.addr %s1627, 64
          %s1629 = scalar_lea.hbm %s7, %s1628
          %s1631 = sshll.u32 %s1599, 4
          %s1632 = int_to_ptr.vmem [resolvable:$true] %s1631
          %1634 = dma.vmem_to_hbm [thread:$0]  %s1632, 128, %s1629, %s1596
        $region68: #{tpu_custom_call.1} parent=43 // pred_fallthru
          _
        // Predicated region
        $region69: #{tpu_custom_call.1} parent=43 // pred_check
          %p1635 = pneg %p232
        $region70: #{tpu_custom_call.1} parent=43 // pred_check_branch
          %1637 = sbr.rel (%p1635) target = $region72
        $region71: #{tpu_custom_call.1} parent=43 // pred_region
          %s1639 = ssub.s32 128, 128
          %1640 = vsyncadd %s1601, %s1639
          %s1641 = smul.addr %s31, 2
          %s1642 = smul.addr %s1641, 64
          %s1643 = scalar_lea.hbm %s8, %s1642
          %s1645 = sshll.u32 %s1604, 4
          %s1646 = int_to_ptr.vmem [resolvable:$true] %s1645
          %1648 = dma.vmem_to_hbm [thread:$0]  %s1646, 128, %s1643, %s1601
        $region72: #{tpu_custom_call.1} parent=43 // pred_fallthru
          _
      $region44: #{tpu_custom_call.1} parent=5 // pred_fallthru
        _
      %p1649 = scmp.le.s32.totalorder 2, %s26
      // Predicated region
      $region73: #{tpu_custom_call.1} parent=5 // pred_check
        %p1650 = pneg %p1649
      $region74: #{tpu_custom_call.1} parent=5 // pred_check_branch
        %1652 = sbr.rel (%p1650) target = $region76
      $region75: #{tpu_custom_call.1} parent=5 // pred_region
        %s1653 = ssub.s32 %s26, 2
        // Predicated region
        $region77: #{tpu_custom_call.1} parent=75 // pred_check
          %p1654 = pneg %p186
        $region78: #{tpu_custom_call.1} parent=75 // pred_check_branch
          %1656 = sbr.rel (%p1654) target = $region80
        $region79: #{tpu_custom_call.1} parent=75 // pred_region
          %s1657 = sand.u32 %s171, 1
          %s1658 = scalar_lea.sflag [#allocation4], %s1657
          %s1659 = sand.u32 %s171, 1
          %s1660 = smul.addr %s1659, 32
          %s1661 = scalar_lea.vmem [#allocation10], %s1660
          %1662 = dma.done %s1658, 512
        $region80: #{tpu_custom_call.1} parent=75 // pred_fallthru
          _
        // Predicated region
        $region81: #{tpu_custom_call.1} parent=75 // pred_check
          %p1663 = pneg %p212
        $region82: #{tpu_custom_call.1} parent=75 // pred_check_branch
          %1665 = sbr.rel (%p1663) target = $region84
        $region83: #{tpu_custom_call.1} parent=75 // pred_region
          %s1666 = sand.u32 %s32, 1
          %s1667 = scalar_lea.sflag [#allocation12], %s1666
          %s1668 = sand.u32 %s197, 1
          %s1669 = smul.addr %s1668, 8
          %s1670 = scalar_lea.vmem [#allocation11], %s1669
          %1671 = dma.done %s1667, 128
        $region84: #{tpu_custom_call.1} parent=75 // pred_fallthru
          _
        // Predicated region
        $region85: #{tpu_custom_call.1} parent=75 // pred_check
          %p1672 = pneg %p238
        $region86: #{tpu_custom_call.1} parent=75 // pred_check_branch
          %1674 = sbr.rel (%p1672) target = $region88
        $region87: #{tpu_custom_call.1} parent=75 // pred_region
          %s1675 = sand.u32 %s32, 1
          %s1676 = scalar_lea.sflag [#allocation12], %s1675
          %s1677 = sand.u32 %s223, 1
          %s1678 = smul.addr %s1677, 8
          %s1679 = scalar_lea.vmem [#allocation13], %s1678
          %1680 = dma.done %s1676, 128
        $region88: #{tpu_custom_call.1} parent=75 // pred_fallthru
          _
      $region76: #{tpu_custom_call.1} parent=5 // pred_fallthru
        _
    $region6: #{tpu_custom_call.1} parent=1 // loop_footer
      %s30 = sadd.s32 1, %s26
    $region7: #{tpu_custom_call.1} parent=1 // loop_footer_branch
      %25 = sbr.rel target = $region3
    $region8: #{tpu_custom_call.1} parent=1 // loop_exit
      _
    %1681 = vsyncpa [#allocation3], 1
    %s1682 = scalar_lea.sflag [#allocation3], 1
    %1683 = vsyncpa %s1682, 1
    %1684 = vsyncpa [#allocation6], 1
    %1685 = vsyncpa [#allocation9], 1
    %1686 = vsyncpa [#allocation4], 1
    %s1687 = scalar_lea.sflag [#allocation4], 1
    %1688 = vsyncpa %s1687, 1
    %1689 = vsyncpa [#allocation12], 1
    %s1690 = scalar_lea.sflag [#allocation12], 1
    %1691 = vsyncpa %s1690, 1

</llo_original>
